<compile_context>
chip_gen: v7x
topology: tpu7x:2x2x1
jax: 0.10.0
libtpu: 0.0.40
codegen_flags: <defaults>
</compile_context>

<pallas_src>
import functools
import math

import jax
import jax.numpy as jnp
from jax.experimental import pallas as pl
from jax.experimental.pallas import tpu as pltpu

_EPS = 1e-5


def _round_up(x, m):
    return ((x + m - 1) // m) * m


def _vmem_limit_bytes():
    """Generation-aware scoped-VMEM limit: ~100 MiB on 128-MiB parts (v5e/v6e),
    ~54 MiB on 64-MiB parts (v7x)."""
    cap = 128 * 1024 * 1024
    try:
        cap = int(getattr(pltpu.get_tpu_info(), "vmem_capacity_bytes", cap))
    except Exception:
        pass
    return min(int(cap * 0.85), 100 * 1024 * 1024)


def _pick_q_tile(nq, cap=256):
    """Query-row tile: full nq if small, else a 256-row tile (multiple of 8)."""
    return nq if nq <= cap else cap


# --------------------------------------------------------------------------
# Kernel 1: self-attention + residual + LayerNorm
#   grid = (batch, query-tiles); K/V use the full query set per batch.
# --------------------------------------------------------------------------
def _make_self_attn_block_kernel(num_heads, head_dim, eps):
    def kernel(xq_ref, posq_ref, xkv_ref, poskv_ref,
               wq_ref, bq_ref, wk_ref, bk_ref, wv_ref, bv_ref,
               wo_ref, bo_ref, g_ref, b_ref, o_ref):
        xq = xq_ref[0]                                     # [tq, e] f32 (query rows)
        xkv = xkv_ref[0]                                   # [nq, e] f32 (all rows)

        q_in = (xq + posq_ref[0]).astype(jnp.bfloat16)
        k_in = (xkv + poskv_ref[0]).astype(jnp.bfloat16)
        v_in = xkv.astype(jnp.bfloat16)

        # separate Q/K/V projections (no wide fused projection => no off-tile
        # lane slicing of the projection output); 1/sqrt(dh) folded into wq/bq.
        q = jnp.dot(q_in, wq_ref[...], preferred_element_type=jnp.float32) + bq_ref[...]
        k = jnp.dot(k_in, wk_ref[...], preferred_element_type=jnp.float32) + bk_ref[...]
        v = jnp.dot(v_in, wv_ref[...], preferred_element_type=jnp.float32) + bv_ref[...]

        heads = []
        for h in range(num_heads):
            sl = slice(h * head_dim, (h + 1) * head_dim)
            s = jnp.dot(q[:, sl].astype(jnp.bfloat16),
                        k[:, sl].astype(jnp.bfloat16).T,
                        preferred_element_type=jnp.float32)           # [tq, nq]
            s = s - jnp.max(s, axis=-1, keepdims=True)
            p = jnp.exp(s)
            p = p / jnp.sum(p, axis=-1, keepdims=True)                # exact softmax
            heads.append(jnp.dot(p.astype(jnp.bfloat16),
                                 v[:, sl].astype(jnp.bfloat16),
                                 preferred_element_type=jnp.float32))  # [tq, dh]

        # single lane-dense [tq, e] @ [e, e] output projection (K = e, not dh)
        attn = jnp.concatenate(heads, axis=-1)
        proj = (jnp.dot(attn.astype(jnp.bfloat16), wo_ref[...],
                        preferred_element_type=jnp.float32) + bo_ref[...])

        y = xq + proj                                      # residual (f32)
        mu = jnp.mean(y, axis=-1, keepdims=True)
        var = jnp.mean((y - mu) ** 2, axis=-1, keepdims=True)
        o_ref[0] = (y - mu) * jax.lax.rsqrt(var + eps) * g_ref[...] + b_ref[...]

    return kernel


def self_attn_norm_block(x, pos, p, gamma, beta, num_heads):
    bs, nq, e = x.shape
    dh = e // num_heads
    scale = 1.0 / math.sqrt(dh)
    tq = _pick_q_tile(nq)
    nqt = pl.cdiv(nq, tq)
    vlim = _vmem_limit_bytes()

    kernel = _make_self_attn_block_kernel(num_heads, dh, _EPS)
    qtile = pl.BlockSpec((1, tq, e), lambda b, i: (b, i, 0))
    full = pl.BlockSpec((1, nq, e), lambda b, i: (b, 0, 0))
    w_ee = pl.BlockSpec((e, e), lambda b, i: (0, 0))
    vec_e = pl.BlockSpec((1, e), lambda b, i: (0, 0))

    return pl.pallas_call(
        kernel,
        out_shape=jax.ShapeDtypeStruct((bs, nq, e), jnp.float32),
        grid=(bs, nqt),
        in_specs=[qtile, qtile, full, full,
                  w_ee, vec_e, w_ee, vec_e, w_ee, vec_e, w_ee, vec_e,
                  vec_e, vec_e],
        out_specs=pl.BlockSpec((1, tq, e), lambda b, i: (b, i, 0)),
        compiler_params=pltpu.CompilerParams(
            dimension_semantics=("parallel", "parallel"),
            vmem_limit_bytes=vlim),
    )(x, pos, x, pos,
      (p['wq'] * scale).astype(jnp.bfloat16), (p['bq'] * scale).reshape(1, e),
      p['wk'].astype(jnp.bfloat16), p['bk'].reshape(1, e),
      p['wv'].astype(jnp.bfloat16), p['bv'].reshape(1, e),
      p['wo'].astype(jnp.bfloat16), p['bo'].reshape(1, e),
      gamma.reshape(1, e), beta.reshape(1, e))


# --------------------------------------------------------------------------
# Kernel 2a: value projection (row-tiled, bf16 output, done once per batch)
# --------------------------------------------------------------------------
def _value_proj_kernel(v_ref, w_ref, b_ref, o_ref):
    o_ref[0] = (jnp.dot(v_ref[0], w_ref[...],
                        preferred_element_type=jnp.float32)
                + b_ref[...]).astype(jnp.bfloat16)


# --------------------------------------------------------------------------
# Kernel 2b: MS-deformable cross-attention + residual + LayerNorm
#   grid = (batch, query-tiles, value-chunks["arbitrary"])
#   value is streamed per chunk; per-head samples are accumulated in a VMEM
#   scratch and a single output-projection matmul runs on the last chunk.
# --------------------------------------------------------------------------
def _make_cross_attn_block_kernel(num_heads, head_dim, num_levels, num_points,
                                  spatial_shapes, chunk, tq, eps):
    LP = num_levels * num_points
    hlp = num_heads * LP
    level_starts = []
    s = 0
    for (hh, ww) in spatial_shapes:
        level_starts.append(s)
        s += hh * ww

    # TODO(synk): replace the dense per-chunk triangular-kernel weight matrix
    # with a gather-based 4-corner sampler (sublane dynamic-gather / DMA gather)
    # to cut the O(heads*levels*points*tq*chunk) VALU work to O(tq*L*P*4).
    def kernel(x_ref, pos_ref, ref_ref, val_ref,
               woa_ref, boa_ref, wout_ref, bout_ref, g_ref, b_ref,
               o_ref, off_sc, attn_sc, acc_sc):
        c = pl.program_id(2)
        n_chunks = pl.num_programs(2)

        # --- once per (batch, q-tile): offsets/weights projection + init ----
        @pl.when(c == 0)
        def _init():
            q = (x_ref[0] + pos_ref[0]).astype(jnp.bfloat16)
            oa = (jnp.dot(q, woa_ref[...], preferred_element_type=jnp.float32)
                  + boa_ref[...])                          # [tq, 3*hlp]
            off_sc[...] = oa[:, :2 * hlp]
            aws = []
            for h in range(num_heads):
                lg = oa[:, 2 * hlp + h * LP: 2 * hlp + (h + 1) * LP]
                lg = lg - jnp.max(lg, axis=-1, keepdims=True)
                ew = jnp.exp(lg)
                aws.append(ew / jnp.sum(ew, axis=-1, keepdims=True))
            attn_sc[...] = jnp.concatenate(aws, axis=-1)   # [tq, hlp]
            acc_sc[...] = jnp.zeros_like(acc_sc)

        # --- every chunk: chunk-local bilinear weights + MXU contraction ----
        refp = ref_ref[0]                                  # [tq, 2L]
        vchunk = val_ref[0]                                # [chunk, e] bf16 (proj'd)
        off = off_sc[...]
        attn = attn_sc[...]

        start = (c * chunk).astype(jnp.float32)
        gidx = jax.lax.broadcasted_iota(jnp.float32, (1, chunk), 1) + start

        lvl_geom = []
        for lvl in range(num_levels):
            Hl, Wl = spatial_shapes[lvl]
            local = gidx - float(level_starts[lvl])
            valid = jnp.logical_and(local >= 0.0, local < float(Hl * Wl))
            row = jnp.floor((local + 0.5) * (1.0 / Wl))
            col = local - row * Wl
            lvl_geom.append((row, col, valid.astype(jnp.float32)))

        head_outs = []
        for h in range(num_heads):
            w_h = jnp.zeros((tq, chunk), jnp.float32)
            for lvl in range(num_levels):
                Hl, Wl = spatial_shapes[lvl]
                row, col, valid = lvl_geom[lvl]
                ref_x = refp[:, 2 * lvl: 2 * lvl + 1]
                ref_y = refp[:, 2 * lvl + 1: 2 * lvl + 2]
                w_lvl = jnp.zeros((tq, chunk), jnp.float32)
                for pnt in range(num_points):
                    kk = (h * num_levels + lvl) * num_points + pnt
                    off_x = off[:, 2 * kk: 2 * kk + 1]
                    off_y = off[:, 2 * kk + 1: 2 * kk + 2]
                    # grid_sample (align_corners=False, zeros padding):
                    # pixel = (ref + off/normalizer) * size - 0.5
                    px = ref_x * Wl + off_x - 0.5
                    py = ref_y * Hl + off_y - 0.5
                    wx = jnp.maximum(0.0, 1.0 - jnp.abs(px - col))
                    wy = jnp.maximum(0.0, 1.0 - jnp.abs(py - row))
                    aidx = h * LP + lvl * num_points + pnt
                    w_lvl = w_lvl + (wx * wy) * attn[:, aidx:aidx + 1]
                w_h = w_h + w_lvl * valid
            head_outs.append(
                jnp.dot(w_h.astype(jnp.bfloat16),
                        vchunk[:, h * head_dim:(h + 1) * head_dim],
                        preferred_element_type=jnp.float32))           # [tq, dh]
        acc_sc[...] += jnp.concatenate(head_outs, axis=-1)

        # --- last chunk: single output projection + residual + LayerNorm ----
        @pl.when(c == n_chunks - 1)
        def _fin():
            x = x_ref[0]
            proj = (jnp.dot(acc_sc[...].astype(jnp.bfloat16), wout_ref[...],
                            preferred_element_type=jnp.float32) + bout_ref[...])
            y = x + proj
            mu = jnp.mean(y, axis=-1, keepdims=True)
            var = jnp.mean((y - mu) ** 2, axis=-1, keepdims=True)
            o_ref[0] = (y - mu) * jax.lax.rsqrt(var + eps) * g_ref[...] + b_ref[...]

    return kernel


def cross_attn_norm_block(x, value_bf16, pos, reference_points, spatial_shapes,
                          p, gamma, beta, num_heads, num_points, chunk_cap=2048):
    bs, nq, e = x.shape
    nv = value_bf16.shape[1]
    L = len(spatial_shapes)
    dh = e // num_heads
    hlp = num_heads * L * num_points
    assert sum(hh * ww for hh, ww in spatial_shapes) == nv
    vlim = _vmem_limit_bytes()

    # spatial chunking of `value` (bounded VMEM on every generation, incl. the
    # 64-MiB v7x); pad with zeros so out-of-range rows stay finite.
    chunk = min(chunk_cap, _round_up(nv, 8))
    nvp = _round_up(nv, chunk)
    if nvp > nv:
        value_bf16 = jnp.pad(value_bf16, ((0, 0), (0, nvp - nv), (0, 0)))
    n_chunks = nvp // chunk

    # value_proj once (not per q-tile), emitted in bf16 => half the streaming DMA.
    v_proj = pl.pallas_call(
        _value_proj_kernel,
        out_shape=jax.ShapeDtypeStruct((bs, nvp, e), jnp.bfloat16),
        grid=(bs, n_chunks),
        in_specs=[pl.BlockSpec((1, chunk, e), lambda b, i: (b, i, 0)),
                  pl.BlockSpec((e, e), lambda b, i: (0, 0)),
                  pl.BlockSpec((1, e), lambda b, i: (0, 0))],
        out_specs=pl.BlockSpec((1, chunk, e), lambda b, i: (b, i, 0)),
        compiler_params=pltpu.CompilerParams(
            dimension_semantics=("parallel", "parallel"),
            vmem_limit_bytes=vlim),
    )(value_bf16, p['w_value'].astype(jnp.bfloat16), p['b_value'].reshape(1, e))

    tq = _pick_q_tile(nq)
    nqt = pl.cdiv(nq, tq)
    ref_flat = reference_points.reshape(bs, nq, L * 2).astype(jnp.float32)
    woa = jnp.concatenate([p['w_off'], p['w_attn']], axis=1).astype(jnp.bfloat16)
    boa = jnp.concatenate([p['b_off'], p['b_attn']]).reshape(1, 3 * hlp)

    kernel = _make_cross_attn_block_kernel(num_heads, dh, L, num_points,
                                           tuple(spatial_shapes), chunk, tq, _EPS)
    qtile = pl.BlockSpec((1, tq, e), lambda b, i, c: (b, i, 0))

    return pl.pallas_call(
        kernel,
        out_shape=jax.ShapeDtypeStruct((bs, nq, e), jnp.float32),
        grid=(bs, nqt, n_chunks),
        in_specs=[qtile, qtile,
                  pl.BlockSpec((1, tq, L * 2), lambda b, i, c: (b, i, 0)),
                  pl.BlockSpec((1, chunk, e), lambda b, i, c: (b, c, 0)),
                  pl.BlockSpec((e, 3 * hlp), lambda b, i, c: (0, 0)),
                  pl.BlockSpec((1, 3 * hlp), lambda b, i, c: (0, 0)),
                  pl.BlockSpec((e, e), lambda b, i, c: (0, 0)),
                  pl.BlockSpec((1, e), lambda b, i, c: (0, 0)),
                  pl.BlockSpec((1, e), lambda b, i, c: (0, 0)),
                  pl.BlockSpec((1, e), lambda b, i, c: (0, 0))],
        out_specs=pl.BlockSpec((1, tq, e), lambda b, i, c: (b, i, 0)),
        scratch_shapes=[pltpu.VMEM((tq, 2 * hlp), jnp.float32),
                        pltpu.VMEM((tq, hlp), jnp.float32),
                        pltpu.VMEM((tq, e), jnp.float32)],
        compiler_params=pltpu.CompilerParams(
            dimension_semantics=("parallel", "parallel", "arbitrary"),
            vmem_limit_bytes=vlim),
    )(x, pos, ref_flat, v_proj, woa, boa,
      p['w_out'].astype(jnp.bfloat16), p['b_out'].reshape(1, e),
      gamma.reshape(1, e), beta.reshape(1, e))


# --------------------------------------------------------------------------
# Kernel 3: FFN + residual + LayerNorm (row-tiled over bs*nq, padded rows)
# --------------------------------------------------------------------------
def _ffn_norm_kernel(x_ref, w1_ref, b1_ref, w2_ref, b2_ref, g_ref, bta_ref,
                     o_ref, *, eps):
    x = x_ref[...]
    h = jnp.maximum(jnp.dot(x.astype(jnp.bfloat16), w1_ref[...],
                            preferred_element_type=jnp.float32)
                    + b1_ref[...], 0.0)
    y = x + jnp.dot(h.astype(jnp.bfloat16), w2_ref[...],
                    preferred_element_type=jnp.float32) + b2_ref[...]
    mu = jnp.mean(y, axis=-1, keepdims=True)
    var = jnp.mean((y - mu) ** 2, axis=-1, keepdims=True)
    o_ref[...] = (y - mu) * jax.lax.rsqrt(var + eps) * g_ref[...] + bta_ref[...]


def ffn_norm_block(x, p, gamma, beta, row_cap=512):
    bs, nq, e = x.shape
    n = bs * nq
    f = p['w1'].shape[1]
    x2 = x.reshape(n, e)

    # big row tiles (no more tm=8 degradation): pad rows to a multiple of tm.
    tm = row_cap if n >= row_cap else _round_up(n, 8)
    n_pad = _round_up(n, tm)
    if n_pad > n:
        x2 = jnp.pad(x2, ((0, n_pad - n), (0, 0)))
    steps = n_pad // tm
    vlim = _vmem_limit_bytes()

    if steps >= 3:   # deepen the pipeline on the only streamed input
        x_spec = pl.BlockSpec((tm, e), lambda i: (i, 0),
                              pipeline_mode=pl.Buffered(3))
    else:
        x_spec = pl.BlockSpec((tm, e), lambda i: (i, 0))

    out = pl.pallas_call(
        functools.partial(_ffn_norm_kernel, eps=_EPS),
        out_shape=jax.ShapeDtypeStruct((n_pad, e), jnp.float32),
        grid=(steps,),
        in_specs=[x_spec,
                  pl.BlockSpec((e, f), lambda i: (0, 0)),
                  pl.BlockSpec((1, f), lambda i: (0, 0)),
                  pl.BlockSpec((f, e), lambda i: (0, 0)),
                  pl.BlockSpec((1, e), lambda i: (0, 0)),
                  pl.BlockSpec((1, e), lambda i: (0, 0)),
                  pl.BlockSpec((1, e), lambda i: (0, 0))],
        out_specs=pl.BlockSpec((tm, e), lambda i: (i, 0)),
        compiler_params=pltpu.CompilerParams(
            dimension_semantics=("parallel",),
            vmem_limit_bytes=vlim),
    )(x2, p['w1'].astype(jnp.bfloat16), p['b1'].reshape(1, f),
      p['w2'].astype(jnp.bfloat16), p['b2'].reshape(1, e),
      gamma.reshape(1, e), beta.reshape(1, e))
    return out[:n].reshape(bs, nq, e)


# --------------------------------------------------------------------------
# BaseTransformerLayer forward
# --------------------------------------------------------------------------
def base_transformer_layer_forward(params, query, key, value, query_pos, key_pos,
                                   reference_points, spatial_shapes,
                                   num_heads, num_points):
    """operation_order = ('self_attn','norm','cross_attn','norm','ffn','norm')."""
    del key, key_pos  # deformable cross-attention ignores key / key_pos
    q = jnp.transpose(query, (1, 0, 2)).astype(jnp.float32)        # [bs, nq, e]
    qp = jnp.transpose(query_pos, (1, 0, 2)).astype(jnp.float32)
    # value is the dominant tensor: move it into the kernels as bf16.
    v = jnp.transpose(value, (1, 0, 2)).astype(jnp.bfloat16)       # [bs, nv, e]
    # TODO(synk): block the native [nq, bs, e] layout directly (squeezed batch
    # dim) to remove these wrapper transposes entirely.

    q = self_attn_norm_block(q, qp, params['self_attn'],
                             params['norm0_g'], params['norm0_b'], num_heads)
    q = cross_attn_norm_block(q, v, qp, reference_points, spatial_shapes,
                              params['cross_attn'],
                              params['norm1_g'], params['norm1_b'],
                              num_heads, num_points)
    q = ffn_norm_block(q, params['ffn'], params['norm2_g'], params['norm2_b'])
    return jnp.transpose(q, (1, 0, 2))                              # [nq, bs, e]


def init_params(key, embed_dims, num_heads, num_levels, num_points,
                feedforward_channels):
    e = embed_dims
    hlp = num_heads * num_levels * num_points
    keys = jax.random.split(key, 10)

    def lin(k, din, dout, scale=0.05):
        kw, kb = jax.random.split(k)
        return (jax.random.normal(kw, (din, dout), jnp.float32) * scale,
                jax.random.normal(kb, (dout,), jnp.float32) * scale)

    wq, bq = lin(keys[0], e, e)
    wk, bk = lin(keys[1], e, e)
    wv, bv = lin(keys[2], e, e)
    wo, bo = lin(keys[3], e, e)
    w_value, b_value = lin(keys[4], e, e)
    w_off, b_off = lin(keys[5], e, hlp * 2)
    w_attn, b_attn = lin(keys[6], e, hlp)
    w_out, b_out = lin(keys[7], e, e)
    w1, b1 = lin(keys[8], e, feedforward_channels)
    w2, b2 = lin(keys[9], feedforward_channels, e)

    return {
        'self_attn': dict(wq=wq, bq=bq, wk=wk, bk=bk, wv=wv, bv=bv, wo=wo, bo=bo),
        'cross_attn': dict(w_value=w_value, b_value=b_value, w_off=w_off,
                           b_off=b_off, w_attn=w_attn, b_attn=b_attn,
                           w_out=w_out, b_out=b_out),
        'ffn': dict(w1=w1, b1=b1, w2=w2, b2=b2),
        'norm0_g': jnp.ones((e,), jnp.float32), 'norm0_b': jnp.zeros((e,), jnp.float32),
        'norm1_g': jnp.ones((e,), jnp.float32), 'norm1_b': jnp.zeros((e,), jnp.float32),
        'norm2_g': jnp.ones((e,), jnp.float32), 'norm2_b': jnp.zeros((e,), jnp.float32),
    }


# --------------------------------------------------------------------------
# Pure-JAX (f32) reference for a parity sanity check at toy shapes.
# --------------------------------------------------------------------------
def _layer_reference(params, query, value, query_pos, reference_points,
                     spatial_shapes, num_heads, num_points):
    q = jnp.transpose(query, (1, 0, 2))
    qp = jnp.transpose(query_pos, (1, 0, 2))
    v = jnp.transpose(value, (1, 0, 2))
    bs, nq, e = q.shape
    dh = e // num_heads
    scale = 1.0 / math.sqrt(dh)

    def ln(x, g, b):
        mu = jnp.mean(x, -1, keepdims=True)
        var = jnp.mean((x - mu) ** 2, -1, keepdims=True)
        return (x - mu) * jax.lax.rsqrt(var + _EPS) * g + b

    p = params['self_attn']
    qq = (q + qp) @ p['wq'] + p['bq']
    kk = (q + qp) @ p['wk'] + p['bk']
    vv = q @ p['wv'] + p['bv']
    outs = []
    for h in range(num_heads):
        sl = slice(h * dh, (h + 1) * dh)
        s = (qq[:, :, sl] * scale) @ jnp.swapaxes(kk[:, :, sl], -1, -2)
        outs.append(jax.nn.softmax(s, axis=-1) @ vv[:, :, sl])
    x = ln(q + jnp.concatenate(outs, -1) @ p['wo'] + p['bo'],
           params['norm0_g'], params['norm0_b'])

    p = params['cross_attn']
    L = len(spatial_shapes)
    LP = L * num_points
    vproj = v @ p['w_value'] + p['b_value']
    qpos = x + qp
    off = qpos @ p['w_off'] + p['b_off']
    aw = jax.nn.softmax((qpos @ p['w_attn'] + p['b_attn'])
                        .reshape(bs, nq, num_heads, LP), axis=-1)
    ref = reference_points
    head_out = []
    for h in range(num_heads):
        acc = jnp.zeros((bs, nq, dh), jnp.float32)
        s0 = 0
        for lvl in range(L):
            Hl, Wl = spatial_shapes[lvl]
            vl = vproj[:, s0:s0 + Hl * Wl, h * dh:(h + 1) * dh]
            col = jnp.arange(Hl * Wl) % Wl
            row = jnp.arange(Hl * Wl) // Wl
            for pnt in range(num_points):
                kk2 = (h * L + lvl) * num_points + pnt
                px = ref[:, :, lvl, 0] * Wl + off[:, :, 2 * kk2] - 0.5
                py = ref[:, :, lvl, 1] * Hl + off[:, :, 2 * kk2 + 1] - 0.5
                wx = jnp.maximum(0.0, 1.0 - jnp.abs(px[..., None] - col))
                wy = jnp.maximum(0.0, 1.0 - jnp.abs(py[..., None] - row))
                w = wx * wy * aw[:, :, h, lvl * num_points + pnt][..., None]
                acc = acc + jnp.einsum('bqs,bsd->bqd', w, vl)
            s0 += Hl * Wl
        head_out.append(acc)
    x = ln(x + jnp.concatenate(head_out, -1) @ p['w_out'] + p['b_out'],
           params['norm1_g'], params['norm1_b'])

    p = params['ffn']
    hdn = jax.nn.relu(x @ p['w1'] + p['b1'])
    x = ln(x + hdn @ p['w2'] + p['b2'], params['norm2_g'], params['norm2_b'])
    return jnp.transpose(x, (1, 0, 2))


if __name__ == "__main__":
    bs, nq, e = 2, 8, 32
    num_heads, num_levels, num_points = 4, 1, 4
    spatial_shapes = ((8, 8),)                 # (h, w) per level, static
    nv = sum(h * w for h, w in spatial_shapes)
    ffn_dim = 64

    root = jax.random.PRNGKey(0)
    k_param, k_q, k_qp, k_v, k_ref = jax.random.split(root, 5)
    params = init_params(k_param, e, num_heads, num_levels, num_points, ffn_dim)

    query = jax.random.normal(k_q, (nq, bs, e), jnp.float32)
    query_pos = jax.random.normal(k_qp, (nq, bs, e), jnp.float32)
    value = jax.random.normal(k_v, (nv, bs, e), jnp.float32)
    key_in = value
    reference_points = jax.random.uniform(k_ref, (bs, nq, num_levels, 2),
                                          jnp.float32)

    out = base_transformer_layer_forward(params, query, key_in, value, query_pos,
                                         None, reference_points, spatial_shapes,
                                         num_heads, num_points)
    jax.block_until_ready(out)
    assert out.shape == (nq, bs, e) and out.dtype == jnp.float32
    assert bool(jnp.all(jnp.isfinite(out)))

    ref_out = _layer_reference(params, query, value, query_pos, reference_points,
                               spatial_shapes, num_heads, num_points)
    max_err = float(jnp.max(jnp.abs(out - ref_out)))
    assert max_err < 0.1, f"parity check failed: max_err={max_err}"
    print("KERNEL_OK")
</pallas_src>

<mosaic_0001>
module attributes {stable_mosaic.version = 11 : i64} {
  func.func @kernel(%arg0: i32, %arg1: i32, %arg2: memref<1x8x32xf32, #tpu.memory_space<vmem>>, %arg3: memref<1x8x32xf32, #tpu.memory_space<vmem>>, %arg4: memref<1x8x32xf32, #tpu.memory_space<vmem>>, %arg5: memref<1x8x32xf32, #tpu.memory_space<vmem>>, %arg6: memref<32x32xbf16, #tpu.memory_space<vmem>>, %arg7: memref<1x32xf32, #tpu.memory_space<vmem>>, %arg8: memref<32x32xbf16, #tpu.memory_space<vmem>>, %arg9: memref<1x32xf32, #tpu.memory_space<vmem>>, %arg10: memref<32x32xbf16, #tpu.memory_space<vmem>>, %arg11: memref<1x32xf32, #tpu.memory_space<vmem>>, %arg12: memref<32x32xbf16, #tpu.memory_space<vmem>>, %arg13: memref<1x32xf32, #tpu.memory_space<vmem>>, %arg14: memref<1x32xf32, #tpu.memory_space<vmem>>, %arg15: memref<1x32xf32, #tpu.memory_space<vmem>>, %arg16: memref<1x8x32xf32, #tpu.memory_space<vmem>>) attributes {dimension_semantics = [#tpu.dimension_semantics<parallel>, #tpu.dimension_semantics<parallel>], iteration_bounds = array<i64: 2, 1>, scalar_prefetch = 0 : i64, scratch_operands = 0 : i64, tpu.core_type = #tpu.core_type<tc>, window_params = [{transform_indices = @transform_0, window_bounds = array<i64: 1, 8, 32>}, {transform_indices = @transform_1, window_bounds = array<i64: 1, 8, 32>}, {transform_indices = @transform_2, window_bounds = array<i64: 1, 8, 32>}, {transform_indices = @transform_3, window_bounds = array<i64: 1, 8, 32>}, {pipeline_mode = #tpu.pipeline_mode<synchronous>, transform_indices = @transform_4, window_bounds = array<i64: 32, 32>}, {pipeline_mode = #tpu.pipeline_mode<synchronous>, transform_indices = @transform_5, window_bounds = array<i64: 1, 32>}, {pipeline_mode = #tpu.pipeline_mode<synchronous>, transform_indices = @transform_6, window_bounds = array<i64: 32, 32>}, {pipeline_mode = #tpu.pipeline_mode<synchronous>, transform_indices = @transform_7, window_bounds = array<i64: 1, 32>}, {pipeline_mode = #tpu.pipeline_mode<synchronous>, transform_indices = @transform_8, window_bounds = array<i64: 32, 32>}, {pipeline_mode = #tpu.pipeline_mode<synchronous>, transform_indices = @transform_9, window_bounds = array<i64: 1, 32>}, {pipeline_mode = #tpu.pipeline_mode<synchronous>, transform_indices = @transform_10, window_bounds = array<i64: 32, 32>}, {pipeline_mode = #tpu.pipeline_mode<synchronous>, transform_indices = @transform_11, window_bounds = array<i64: 1, 32>}, {pipeline_mode = #tpu.pipeline_mode<synchronous>, transform_indices = @transform_12, window_bounds = array<i64: 1, 32>}, {pipeline_mode = #tpu.pipeline_mode<synchronous>, transform_indices = @transform_13, window_bounds = array<i64: 1, 32>}, {transform_indices = @transform_14, window_bounds = array<i64: 1, 8, 32>}]} {
    %c0 = arith.constant 0 : index
    %c0_0 = arith.constant 0 : index
    %c0_1 = arith.constant 0 : index
    %0 = vector.load %arg2[%c0, %c0_0, %c0_1] : memref<1x8x32xf32, #tpu.memory_space<vmem>>, vector<1x8x32xf32>
    %1 = vector.shape_cast %0 : vector<1x8x32xf32> to vector<8x32xf32>
    %c0_2 = arith.constant 0 : index
    %c0_3 = arith.constant 0 : index
    %c0_4 = arith.constant 0 : index
    %2 = vector.load %arg4[%c0_2, %c0_3, %c0_4] : memref<1x8x32xf32, #tpu.memory_space<vmem>>, vector<1x8x32xf32>
    %3 = vector.shape_cast %2 : vector<1x8x32xf32> to vector<8x32xf32>
    %c0_5 = arith.constant 0 : index
    %c0_6 = arith.constant 0 : index
    %c0_7 = arith.constant 0 : index
    %4 = vector.load %arg3[%c0_5, %c0_6, %c0_7] : memref<1x8x32xf32, #tpu.memory_space<vmem>>, vector<1x8x32xf32>
    %5 = vector.shape_cast %4 : vector<1x8x32xf32> to vector<8x32xf32>
    %6 = arith.addf %1, %5 : vector<8x32xf32>
    %7 = arith.truncf %6 : vector<8x32xf32> to vector<8x32xbf16>
    %c0_8 = arith.constant 0 : index
    %c0_9 = arith.constant 0 : index
    %c0_10 = arith.constant 0 : index
    %8 = vector.load %arg5[%c0_8, %c0_9, %c0_10] : memref<1x8x32xf32, #tpu.memory_space<vmem>>, vector<1x8x32xf32>
    %9 = vector.shape_cast %8 : vector<1x8x32xf32> to vector<8x32xf32>
    %10 = arith.addf %3, %9 : vector<8x32xf32>
    %11 = arith.truncf %10 : vector<8x32xf32> to vector<8x32xbf16>
    %12 = arith.truncf %3 : vector<8x32xf32> to vector<8x32xbf16>
    %c0_11 = arith.constant 0 : index
    %c0_12 = arith.constant 0 : index
    %13 = vector.load %arg6[%c0_11, %c0_12] : memref<32x32xbf16, #tpu.memory_space<vmem>>, vector<32x32xbf16>
    %cst = arith.constant dense<0.000000e+00> : vector<8x32xf32>
    %14 = tpu.matmul %7, %13, %cst {dimension_numbers = #tpu.dot_dimension_numbers<[1], [0], [0], [1], [0, 0, 1, 1], [], []>} : vector<8x32xbf16>, vector<32x32xbf16>, vector<8x32xf32> -> vector<8x32xf32>
    %c0_13 = arith.constant 0 : index
    %c0_14 = arith.constant 0 : index
    %15 = vector.load %arg7[%c0_13, %c0_14] : memref<1x32xf32, #tpu.memory_space<vmem>>, vector<1x32xf32>
    %16 = vector.broadcast %15 : vector<1x32xf32> to vector<8x32xf32>
    %17 = arith.addf %14, %16 : vector<8x32xf32>
    %c0_15 = arith.constant 0 : index
    %c0_16 = arith.constant 0 : index
    %18 = vector.load %arg8[%c0_15, %c0_16] : memref<32x32xbf16, #tpu.memory_space<vmem>>, vector<32x32xbf16>
    %cst_17 = arith.constant dense<0.000000e+00> : vector<8x32xf32>
    %19 = tpu.matmul %11, %18, %cst_17 {dimension_numbers = #tpu.dot_dimension_numbers<[1], [0], [0], [1], [0, 0, 1, 1], [], []>} : vector<8x32xbf16>, vector<32x32xbf16>, vector<8x32xf32> -> vector<8x32xf32>
    %c0_18 = arith.constant 0 : index
    %c0_19 = arith.constant 0 : index
    %20 = vector.load %arg9[%c0_18, %c0_19] : memref<1x32xf32, #tpu.memory_space<vmem>>, vector<1x32xf32>
    %21 = vector.broadcast %20 : vector<1x32xf32> to vector<8x32xf32>
    %22 = arith.addf %19, %21 : vector<8x32xf32>
    %c0_20 = arith.constant 0 : index
    %c0_21 = arith.constant 0 : index
    %23 = vector.load %arg10[%c0_20, %c0_21] : memref<32x32xbf16, #tpu.memory_space<vmem>>, vector<32x32xbf16>
    %cst_22 = arith.constant dense<0.000000e+00> : vector<8x32xf32>
    %24 = tpu.matmul %12, %23, %cst_22 {dimension_numbers = #tpu.dot_dimension_numbers<[1], [0], [0], [1], [0, 0, 1, 1], [], []>} : vector<8x32xbf16>, vector<32x32xbf16>, vector<8x32xf32> -> vector<8x32xf32>
    %c0_23 = arith.constant 0 : index
    %c0_24 = arith.constant 0 : index
    %25 = vector.load %arg11[%c0_23, %c0_24] : memref<1x32xf32, #tpu.memory_space<vmem>>, vector<1x32xf32>
    %26 = vector.broadcast %25 : vector<1x32xf32> to vector<8x32xf32>
    %27 = arith.addf %24, %26 : vector<8x32xf32>
    %28 = vector.extract_strided_slice %17 {offsets = [0, 0], sizes = [8, 8], strides = [1, 1]} : vector<8x32xf32> to vector<8x8xf32>
    %29 = arith.truncf %28 : vector<8x8xf32> to vector<8x8xbf16>
    %30 = vector.extract_strided_slice %22 {offsets = [0, 0], sizes = [8, 8], strides = [1, 1]} : vector<8x32xf32> to vector<8x8xf32>
    %31 = arith.truncf %30 : vector<8x8xf32> to vector<8x8xbf16>
    %32 = tpu.transpose %31, [1, 0] : vector<8x8xbf16> -> vector<8x8xbf16>
    %cst_25 = arith.constant dense<0.000000e+00> : vector<8x8xf32>
    %33 = tpu.matmul %29, %32, %cst_25 {dimension_numbers = #tpu.dot_dimension_numbers<[1], [0], [0], [1], [0, 0, 1, 1], [], []>} : vector<8x8xbf16>, vector<8x8xbf16>, vector<8x8xf32> -> vector<8x8xf32>
    %cst_26 = arith.constant dense<0xFF800000> : vector<8xf32>
    %34 = vector.multi_reduction <maximumf>, %33, %cst_26 [1] : vector<8x8xf32> to vector<8xf32>
    %35 = vector.shape_cast %34 : vector<8xf32> to vector<8x1xf32>
    %36 = vector.broadcast %35 : vector<8x1xf32> to vector<8x8xf32>
    %37 = arith.subf %33, %36 : vector<8x8xf32>
    %38 = math.exp %37 : vector<8x8xf32>
    %cst_27 = arith.constant dense<0.000000e+00> : vector<8xf32>
    %39 = vector.multi_reduction <add>, %38, %cst_27 [1] : vector<8x8xf32> to vector<8xf32>
    %40 = vector.shape_cast %39 : vector<8xf32> to vector<8x1xf32>
    %41 = vector.broadcast %40 : vector<8x1xf32> to vector<8x8xf32>
    %42 = arith.divf %38, %41 : vector<8x8xf32>
    %43 = arith.truncf %42 : vector<8x8xf32> to vector<8x8xbf16>
    %44 = vector.extract_strided_slice %27 {offsets = [0, 0], sizes = [8, 8], strides = [1, 1]} : vector<8x32xf32> to vector<8x8xf32>
    %45 = arith.truncf %44 : vector<8x8xf32> to vector<8x8xbf16>
    %cst_28 = arith.constant dense<0.000000e+00> : vector<8x8xf32>
    %46 = tpu.matmul %43, %45, %cst_28 {dimension_numbers = #tpu.dot_dimension_numbers<[1], [0], [0], [1], [0, 0, 1, 1], [], []>} : vector<8x8xbf16>, vector<8x8xbf16>, vector<8x8xf32> -> vector<8x8xf32>
    %47 = vector.extract_strided_slice %17 {offsets = [0, 8], sizes = [8, 8], strides = [1, 1]} : vector<8x32xf32> to vector<8x8xf32>
    %48 = arith.truncf %47 : vector<8x8xf32> to vector<8x8xbf16>
    %49 = vector.extract_strided_slice %22 {offsets = [0, 8], sizes = [8, 8], strides = [1, 1]} : vector<8x32xf32> to vector<8x8xf32>
    %50 = arith.truncf %49 : vector<8x8xf32> to vector<8x8xbf16>
    %51 = tpu.transpose %50, [1, 0] : vector<8x8xbf16> -> vector<8x8xbf16>
    %cst_29 = arith.constant dense<0.000000e+00> : vector<8x8xf32>
    %52 = tpu.matmul %48, %51, %cst_29 {dimension_numbers = #tpu.dot_dimension_numbers<[1], [0], [0], [1], [0, 0, 1, 1], [], []>} : vector<8x8xbf16>, vector<8x8xbf16>, vector<8x8xf32> -> vector<8x8xf32>
    %cst_30 = arith.constant dense<0xFF800000> : vector<8xf32>
    %53 = vector.multi_reduction <maximumf>, %52, %cst_30 [1] : vector<8x8xf32> to vector<8xf32>
    %54 = vector.shape_cast %53 : vector<8xf32> to vector<8x1xf32>
    %55 = vector.broadcast %54 : vector<8x1xf32> to vector<8x8xf32>
    %56 = arith.subf %52, %55 : vector<8x8xf32>
    %57 = math.exp %56 : vector<8x8xf32>
    %cst_31 = arith.constant dense<0.000000e+00> : vector<8xf32>
    %58 = vector.multi_reduction <add>, %57, %cst_31 [1] : vector<8x8xf32> to vector<8xf32>
    %59 = vector.shape_cast %58 : vector<8xf32> to vector<8x1xf32>
    %60 = vector.broadcast %59 : vector<8x1xf32> to vector<8x8xf32>
    %61 = arith.divf %57, %60 : vector<8x8xf32>
    %62 = arith.truncf %61 : vector<8x8xf32> to vector<8x8xbf16>
    %63 = vector.extract_strided_slice %27 {offsets = [0, 8], sizes = [8, 8], strides = [1, 1]} : vector<8x32xf32> to vector<8x8xf32>
    %64 = arith.truncf %63 : vector<8x8xf32> to vector<8x8xbf16>
    %cst_32 = arith.constant dense<0.000000e+00> : vector<8x8xf32>
    %65 = tpu.matmul %62, %64, %cst_32 {dimension_numbers = #tpu.dot_dimension_numbers<[1], [0], [0], [1], [0, 0, 1, 1], [], []>} : vector<8x8xbf16>, vector<8x8xbf16>, vector<8x8xf32> -> vector<8x8xf32>
    %66 = vector.extract_strided_slice %17 {offsets = [0, 16], sizes = [8, 8], strides = [1, 1]} : vector<8x32xf32> to vector<8x8xf32>
    %67 = arith.truncf %66 : vector<8x8xf32> to vector<8x8xbf16>
    %68 = vector.extract_strided_slice %22 {offsets = [0, 16], sizes = [8, 8], strides = [1, 1]} : vector<8x32xf32> to vector<8x8xf32>
    %69 = arith.truncf %68 : vector<8x8xf32> to vector<8x8xbf16>
    %70 = tpu.transpose %69, [1, 0] : vector<8x8xbf16> -> vector<8x8xbf16>
    %cst_33 = arith.constant dense<0.000000e+00> : vector<8x8xf32>
    %71 = tpu.matmul %67, %70, %cst_33 {dimension_numbers = #tpu.dot_dimension_numbers<[1], [0], [0], [1], [0, 0, 1, 1], [], []>} : vector<8x8xbf16>, vector<8x8xbf16>, vector<8x8xf32> -> vector<8x8xf32>
    %cst_34 = arith.constant dense<0xFF800000> : vector<8xf32>
    %72 = vector.multi_reduction <maximumf>, %71, %cst_34 [1] : vector<8x8xf32> to vector<8xf32>
    %73 = vector.shape_cast %72 : vector<8xf32> to vector<8x1xf32>
    %74 = vector.broadcast %73 : vector<8x1xf32> to vector<8x8xf32>
    %75 = arith.subf %71, %74 : vector<8x8xf32>
    %76 = math.exp %75 : vector<8x8xf32>
    %cst_35 = arith.constant dense<0.000000e+00> : vector<8xf32>
    %77 = vector.multi_reduction <add>, %76, %cst_35 [1] : vector<8x8xf32> to vector<8xf32>
    %78 = vector.shape_cast %77 : vector<8xf32> to vector<8x1xf32>
    %79 = vector.broadcast %78 : vector<8x1xf32> to vector<8x8xf32>
    %80 = arith.divf %76, %79 : vector<8x8xf32>
    %81 = arith.truncf %80 : vector<8x8xf32> to vector<8x8xbf16>
    %82 = vector.extract_strided_slice %27 {offsets = [0, 16], sizes = [8, 8], strides = [1, 1]} : vector<8x32xf32> to vector<8x8xf32>
    %83 = arith.truncf %82 : vector<8x8xf32> to vector<8x8xbf16>
    %cst_36 = arith.constant dense<0.000000e+00> : vector<8x8xf32>
    %84 = tpu.matmul %81, %83, %cst_36 {dimension_numbers = #tpu.dot_dimension_numbers<[1], [0], [0], [1], [0, 0, 1, 1], [], []>} : vector<8x8xbf16>, vector<8x8xbf16>, vector<8x8xf32> -> vector<8x8xf32>
    %85 = vector.extract_strided_slice %17 {offsets = [0, 24], sizes = [8, 8], strides = [1, 1]} : vector<8x32xf32> to vector<8x8xf32>
    %86 = arith.truncf %85 : vector<8x8xf32> to vector<8x8xbf16>
    %87 = vector.extract_strided_slice %22 {offsets = [0, 24], sizes = [8, 8], strides = [1, 1]} : vector<8x32xf32> to vector<8x8xf32>
    %88 = arith.truncf %87 : vector<8x8xf32> to vector<8x8xbf16>
    %89 = tpu.transpose %88, [1, 0] : vector<8x8xbf16> -> vector<8x8xbf16>
    %cst_37 = arith.constant dense<0.000000e+00> : vector<8x8xf32>
    %90 = tpu.matmul %86, %89, %cst_37 {dimension_numbers = #tpu.dot_dimension_numbers<[1], [0], [0], [1], [0, 0, 1, 1], [], []>} : vector<8x8xbf16>, vector<8x8xbf16>, vector<8x8xf32> -> vector<8x8xf32>
    %cst_38 = arith.constant dense<0xFF800000> : vector<8xf32>
    %91 = vector.multi_reduction <maximumf>, %90, %cst_38 [1] : vector<8x8xf32> to vector<8xf32>
    %92 = vector.shape_cast %91 : vector<8xf32> to vector<8x1xf32>
    %93 = vector.broadcast %92 : vector<8x1xf32> to vector<8x8xf32>
    %94 = arith.subf %90, %93 : vector<8x8xf32>
    %95 = math.exp %94 : vector<8x8xf32>
    %cst_39 = arith.constant dense<0.000000e+00> : vector<8xf32>
    %96 = vector.multi_reduction <add>, %95, %cst_39 [1] : vector<8x8xf32> to vector<8xf32>
    %97 = vector.shape_cast %96 : vector<8xf32> to vector<8x1xf32>
    %98 = vector.broadcast %97 : vector<8x1xf32> to vector<8x8xf32>
    %99 = arith.divf %95, %98 : vector<8x8xf32>
    %100 = arith.truncf %99 : vector<8x8xf32> to vector<8x8xbf16>
    %101 = vector.extract_strided_slice %27 {offsets = [0, 24], sizes = [8, 8], strides = [1, 1]} : vector<8x32xf32> to vector<8x8xf32>
    %102 = arith.truncf %101 : vector<8x8xf32> to vector<8x8xbf16>
    %cst_40 = arith.constant dense<0.000000e+00> : vector<8x8xf32>
    %103 = tpu.matmul %100, %102, %cst_40 {dimension_numbers = #tpu.dot_dimension_numbers<[1], [0], [0], [1], [0, 0, 1, 1], [], []>} : vector<8x8xbf16>, vector<8x8xbf16>, vector<8x8xf32> -> vector<8x8xf32>
    %104 = tpu.concatenate %46, %65, %84, %103 in 1 : vector<8x8xf32>, vector<8x8xf32>, vector<8x8xf32>, vector<8x8xf32> -> vector<8x32xf32>
    %105 = arith.truncf %104 : vector<8x32xf32> to vector<8x32xbf16>
    %c0_41 = arith.constant 0 : index
    %c0_42 = arith.constant 0 : index
    %106 = vector.load %arg12[%c0_41, %c0_42] : memref<32x32xbf16, #tpu.memory_space<vmem>>, vector<32x32xbf16>
    %cst_43 = arith.constant dense<0.000000e+00> : vector<8x32xf32>
    %107 = tpu.matmul %105, %106, %cst_43 {dimension_numbers = #tpu.dot_dimension_numbers<[1], [0], [0], [1], [0, 0, 1, 1], [], []>} : vector<8x32xbf16>, vector<32x32xbf16>, vector<8x32xf32> -> vector<8x32xf32>
    %c0_44 = arith.constant 0 : index
    %c0_45 = arith.constant 0 : index
    %108 = vector.load %arg13[%c0_44, %c0_45] : memref<1x32xf32, #tpu.memory_space<vmem>>, vector<1x32xf32>
    %109 = vector.broadcast %108 : vector<1x32xf32> to vector<8x32xf32>
    %110 = arith.addf %107, %109 : vector<8x32xf32>
    %111 = arith.addf %1, %110 : vector<8x32xf32>
    %cst_46 = arith.constant dense<0.000000e+00> : vector<8xf32>
    %112 = vector.multi_reduction <add>, %111, %cst_46 [1] : vector<8x32xf32> to vector<8xf32>
    %113 = vector.shape_cast %112 : vector<8xf32> to vector<8x1xf32>
    %cst_47 = arith.constant 3.200000e+01 : f32
    %114 = vector.broadcast %cst_47 : f32 to vector<8x1xf32>
    %115 = arith.divf %113, %114 : vector<8x1xf32>
    %116 = vector.broadcast %115 : vector<8x1xf32> to vector<8x32xf32>
    %117 = arith.subf %111, %116 : vector<8x32xf32>
    %118 = arith.mulf %117, %117 : vector<8x32xf32>
    %cst_48 = arith.constant dense<0.000000e+00> : vector<8xf32>
    %119 = vector.multi_reduction <add>, %118, %cst_48 [1] : vector<8x32xf32> to vector<8xf32>
    %120 = vector.shape_cast %119 : vector<8xf32> to vector<8x1xf32>
    %cst_49 = arith.constant 3.200000e+01 : f32
    %121 = vector.broadcast %cst_49 : f32 to vector<8x1xf32>
    %122 = arith.divf %120, %121 : vector<8x1xf32>
    %123 = vector.broadcast %115 : vector<8x1xf32> to vector<8x32xf32>
    %124 = arith.subf %111, %123 : vector<8x32xf32>
    %cst_50 = arith.constant 9.99999974E-6 : f32
    %125 = vector.broadcast %cst_50 : f32 to vector<8x1xf32>
    %126 = arith.addf %122, %125 : vector<8x1xf32>
    %127 = math.rsqrt %126 : vector<8x1xf32>
    %128 = vector.broadcast %127 : vector<8x1xf32> to vector<8x32xf32>
    %129 = arith.mulf %124, %128 : vector<8x32xf32>
    %c0_51 = arith.constant 0 : index
    %c0_52 = arith.constant 0 : index
    %130 = vector.load %arg14[%c0_51, %c0_52] : memref<1x32xf32, #tpu.memory_space<vmem>>, vector<1x32xf32>
    %131 = vector.broadcast %130 : vector<1x32xf32> to vector<8x32xf32>
    %132 = arith.mulf %129, %131 : vector<8x32xf32>
    %c0_53 = arith.constant 0 : index
    %c0_54 = arith.constant 0 : index
    %133 = vector.load %arg15[%c0_53, %c0_54] : memref<1x32xf32, #tpu.memory_space<vmem>>, vector<1x32xf32>
    %134 = vector.broadcast %133 : vector<1x32xf32> to vector<8x32xf32>
    %135 = arith.addf %132, %134 : vector<8x32xf32>
    %c0_55 = arith.constant 0 : index
    %c0_56 = arith.constant 0 : index
    %c0_57 = arith.constant 0 : index
    %136 = vector.load %arg16[%c0_55, %c0_56, %c0_57] : memref<1x8x32xf32, #tpu.memory_space<vmem>>, vector<1x8x32xf32>
    %137 = vector.shape_cast %136 : vector<1x8x32xf32> to vector<8x32xf32>
    %138 = vector.shape_cast %135 : vector<8x32xf32> to vector<1x8x32xf32>
    tpu.vector_store %arg16[%c0_55, %c0_56, %c0_57], %138 {strides = array<i32>} : memref<1x8x32xf32, #tpu.memory_space<vmem>>, vector<1x8x32xf32>,
    return
  }
  func.func @transform_0(%arg0: i32, %arg1: i32) -> (i32, i32, i32) {
    %c0_i32 = arith.constant 0 : i32
    %c0_i32_0 = arith.constant 0 : i32
    return %arg0, %arg1, %c0_i32 : i32, i32, i32
  }
  func.func @transform_1(%arg0: i32, %arg1: i32) -> (i32, i32, i32) {
    %c0_i32 = arith.constant 0 : i32
    %c0_i32_0 = arith.constant 0 : i32
    return %arg0, %arg1, %c0_i32 : i32, i32, i32
  }
  func.func @transform_2(%arg0: i32, %arg1: i32) -> (i32, i32, i32) {
    %c0_i32 = arith.constant 0 : i32
    %c0_i32_0 = arith.constant 0 : i32
    %c0_i32_1 = arith.constant 0 : i32
    return %arg0, %c0_i32, %c0_i32_0 : i32, i32, i32
  }
  func.func @transform_3(%arg0: i32, %arg1: i32) -> (i32, i32, i32) {
    %c0_i32 = arith.constant 0 : i32
    %c0_i32_0 = arith.constant 0 : i32
    %c0_i32_1 = arith.constant 0 : i32
    return %arg0, %c0_i32, %c0_i32_0 : i32, i32, i32
  }
  func.func @transform_4(%arg0: i32, %arg1: i32) -> (i32, i32) {
    %c0_i32 = arith.constant 0 : i32
    %c0_i32_0 = arith.constant 0 : i32
    %c0_i32_1 = arith.constant 0 : i32
    return %c0_i32, %c0_i32_0 : i32, i32
  }
  func.func @transform_5(%arg0: i32, %arg1: i32) -> (i32, i32) {
    %c0_i32 = arith.constant 0 : i32
    %c0_i32_0 = arith.constant 0 : i32
    %c0_i32_1 = arith.constant 0 : i32
    return %c0_i32, %c0_i32_0 : i32, i32
  }
  func.func @transform_6(%arg0: i32, %arg1: i32) -> (i32, i32) {
    %c0_i32 = arith.constant 0 : i32
    %c0_i32_0 = arith.constant 0 : i32
    %c0_i32_1 = arith.constant 0 : i32
    return %c0_i32, %c0_i32_0 : i32, i32
  }
  func.func @transform_7(%arg0: i32, %arg1: i32) -> (i32, i32) {
    %c0_i32 = arith.constant 0 : i32
    %c0_i32_0 = arith.constant 0 : i32
    %c0_i32_1 = arith.constant 0 : i32
    return %c0_i32, %c0_i32_0 : i32, i32
  }
  func.func @transform_8(%arg0: i32, %arg1: i32) -> (i32, i32) {
    %c0_i32 = arith.constant 0 : i32
    %c0_i32_0 = arith.constant 0 : i32
    %c0_i32_1 = arith.constant 0 : i32
    return %c0_i32, %c0_i32_0 : i32, i32
  }
  func.func @transform_9(%arg0: i32, %arg1: i32) -> (i32, i32) {
    %c0_i32 = arith.constant 0 : i32
    %c0_i32_0 = arith.constant 0 : i32
    %c0_i32_1 = arith.constant 0 : i32
    return %c0_i32, %c0_i32_0 : i32, i32
  }
  func.func @transform_10(%arg0: i32, %arg1: i32) -> (i32, i32) {
    %c0_i32 = arith.constant 0 : i32
    %c0_i32_0 = arith.constant 0 : i32
    %c0_i32_1 = arith.constant 0 : i32
    return %c0_i32, %c0_i32_0 : i32, i32
  }
  func.func @transform_11(%arg0: i32, %arg1: i32) -> (i32, i32) {
    %c0_i32 = arith.constant 0 : i32
    %c0_i32_0 = arith.constant 0 : i32
    %c0_i32_1 = arith.constant 0 : i32
    return %c0_i32, %c0_i32_0 : i32, i32
  }
  func.func @transform_12(%arg0: i32, %arg1: i32) -> (i32, i32) {
    %c0_i32 = arith.constant 0 : i32
    %c0_i32_0 = arith.constant 0 : i32
    %c0_i32_1 = arith.constant 0 : i32
    return %c0_i32, %c0_i32_0 : i32, i32
  }
  func.func @transform_13(%arg0: i32, %arg1: i32) -> (i32, i32) {
    %c0_i32 = arith.constant 0 : i32
    %c0_i32_0 = arith.constant 0 : i32
    %c0_i32_1 = arith.constant 0 : i32
    return %c0_i32, %c0_i32_0 : i32, i32
  }
  func.func @transform_14(%arg0: i32, %arg1: i32) -> (i32, i32, i32) {
    %c0_i32 = arith.constant 0 : i32
    %c0_i32_0 = arith.constant 0 : i32
    return %arg0, %arg1, %c0_i32 : i32, i32, i32
  }
}

</mosaic_0001>

<llo_original>
// kernel: tpu_custom_call.1
$region0: #{tpu_custom_call.1}
  #allocation0 [shape = 'u32[]', space=smem, size = 0x4, offset = 0x4, fixed_abs, tag = 'smem constant byte address 0x4 - core index']
  #allocation1 [shape = 'u32[144,128]{1,0:T(1,128)}', space=vmem, size = 0x12000, scoped, tag = 'internal scratch']
  %s0 = inlined_call_operand.hbm [shape: f32[2,8,32], index: 0, kind: input, shape index: {}]
  %s1 = inlined_call_operand.hbm [shape: f32[2,8,32], index: 1, kind: input, shape index: {}]
  %s2 = inlined_call_operand.hbm [shape: f32[2,8,32], index: 2, kind: input, shape index: {}]
  %s3 = inlined_call_operand.hbm [shape: f32[2,8,32], index: 3, kind: input, shape index: {}]
  %s4 = inlined_call_operand.hbm [shape: bf16[32,32], index: 4, kind: input, shape index: {}]
  %s5 = inlined_call_operand.hbm [shape: f32[1,32], index: 5, kind: input, shape index: {}]
  %s6 = inlined_call_operand.hbm [shape: bf16[32,32], index: 6, kind: input, shape index: {}]
  %s7 = inlined_call_operand.hbm [shape: f32[1,32], index: 7, kind: input, shape index: {}]
  %s8 = inlined_call_operand.hbm [shape: bf16[32,32], index: 8, kind: input, shape index: {}]
  %s9 = inlined_call_operand.hbm [shape: f32[1,32], index: 9, kind: input, shape index: {}]
  %s10 = inlined_call_operand.hbm [shape: bf16[32,32], index: 10, kind: input, shape index: {}]
  %s11 = inlined_call_operand.hbm [shape: f32[1,32], index: 11, kind: input, shape index: {}]
  %s12 = inlined_call_operand.hbm [shape: f32[1,32], index: 12, kind: input, shape index: {}]
  %s13 = inlined_call_operand.hbm [shape: f32[1,32], index: 13, kind: input, shape index: {}]
  %s14 = inlined_call_operand.hbm [shape: f32[2,8,32], index: 14, kind: output, shape index: {}]
  %s15 = sld [smem:[#allocation0]]
  $region145: #{tpu_custom_call.1} parent=0
    _
  %s17 = ssub.s32 1, %s15
  %s18 = scalar_select 0, %s17, %s15
  $region1: #{tpu_custom_call.1} parent=0
    #allocation2 [shape = 'u8[8192]{0}', space=vmem, size = 0x2000, scoped, tag = 'input window, operand 0']
    #allocation3 [shape = 's32[2]{0}', space=sflag, size = 0x8, scoped, tag = 'scoped memory for tpu_custom_call.1']
    #allocation4 [shape = 's32[2]{0}', space=sflag, size = 0x8, scoped, tag = 'scoped memory for tpu_custom_call.1']
    #allocation5 [shape = 'u8[8192]{0}', space=vmem, size = 0x2000, scoped, tag = 'input window, operand 1']
    #allocation6 [shape = 's32[2]{0}', space=sflag, size = 0x8, scoped, tag = 'scoped memory for tpu_custom_call.1']
    #allocation7 [shape = 'u8[8192]{0}', space=vmem, size = 0x2000, scoped, tag = 'input window, operand 2']
    #allocation8 [shape = 'u8[8192]{0}', space=vmem, size = 0x2000, scoped, tag = 'input window, operand 3']
    #allocation9 [shape = 's32[2]{0}', space=sflag, size = 0x8, scoped, tag = 'scoped memory for tpu_custom_call.1']
    #allocation10 [shape = 'u8[8192]{0}', space=vmem, size = 0x2000, scoped, tag = 'input window, operand 4, single buffered']
    #allocation11 [shape = 'u8[512]{0}', space=vmem, size = 0x400, scoped, tag = 'input window, operand 5, single buffered']
    #allocation12 [shape = 's32[1]{0}', space=sflag, size = 0x4, scoped, tag = 'scoped memory for tpu_custom_call.1']
    #allocation13 [shape = 'u8[8192]{0}', space=vmem, size = 0x2000, scoped, tag = 'input window, operand 6, single buffered']
    #allocation14 [shape = 'u8[512]{0}', space=vmem, size = 0x400, scoped, tag = 'input window, operand 7, single buffered']
    #allocation15 [shape = 's32[1]{0}', space=sflag, size = 0x4, scoped, tag = 'scoped memory for tpu_custom_call.1']
    #allocation16 [shape = 'u8[8192]{0}', space=vmem, size = 0x2000, scoped, tag = 'input window, operand 8, single buffered']
    #allocation17 [shape = 'u8[512]{0}', space=vmem, size = 0x400, scoped, tag = 'input window, operand 9, single buffered']
    #allocation18 [shape = 's32[1]{0}', space=sflag, size = 0x4, scoped, tag = 'scoped memory for tpu_custom_call.1']
    #allocation19 [shape = 'u8[8192]{0}', space=vmem, size = 0x2000, scoped, tag = 'input window, operand 10, single buffered']
    #allocation20 [shape = 'u8[512]{0}', space=vmem, size = 0x400, scoped, tag = 'input window, operand 11, single buffered']
    #allocation21 [shape = 's32[1]{0}', space=sflag, size = 0x4, scoped, tag = 'scoped memory for tpu_custom_call.1']
    #allocation22 [shape = 'u8[512]{0}', space=vmem, size = 0x400, scoped, tag = 'input window, operand 12, single buffered']
    #allocation23 [shape = 'u8[512]{0}', space=vmem, size = 0x400, scoped, tag = 'input window, operand 13, single buffered']
    #allocation24 [shape = 's32[1]{0}', space=sflag, size = 0x4, scoped, tag = 'scoped memory for tpu_custom_call.1']
    #allocation25 [shape = 'u8[8192]{0}', space=vmem, size = 0x2000, scoped, tag = 'output window, operand 0']
    %19 = vsyncpa [#allocation3], 0
    %s20 = scalar_lea.sflag [#allocation3], 1
    %21 = vsyncpa %s20, 0
    %22 = vsyncpa [#allocation6], 0
    %s23 = scalar_lea.sflag [#allocation6], 1
    %24 = vsyncpa %s23, 0
    %25 = vsyncpa [#allocation9], 0
    %s26 = scalar_lea.sflag [#allocation9], 1
    %27 = vsyncpa %s26, 0
    %28 = vsyncpa [#allocation12], 0
    %29 = vsyncpa [#allocation15], 0
    %30 = vsyncpa [#allocation18], 0
    %31 = vsyncpa [#allocation21], 0
    %32 = vsyncpa [#allocation24], 0
    %33 = vsyncpa [#allocation4], 0
    %s34 = scalar_lea.sflag [#allocation4], 1
    %35 = vsyncpa %s34, 0
    loop: start=0, step=1, limit=4
    $region2: #{tpu_custom_call.1} parent=1 // loop_pre_header
      _
    $region3: #{tpu_custom_call.1} parent=1 // loop_header
      %s37 = sphi 0, %s41
      %p38 = scmp.ge.s32.totalorder %s37, 4
      %s44 = sphi 0, %s56
      %s45 = sphi 0, %s52
      %s46 = sphi 0, %s44
      %s47 = sphi 0, %s45
      %s48 = sphi 0, %s46
      %s49 = sphi 0, %s47
      %s61 = sphi 0, %s63
      %s64 = sphi 0, %s61
      %s65 = sphi 0, %s64
      %s81 = sphi 0, %s65
      %s89 = sphi 0, %s91
      %s92 = sphi 0, %s89
      %s93 = sphi 0, %s92
      %s109 = sphi 0, %s93
      %s115 = sphi 0, %s117
      %s118 = sphi 0, %s115
      %s119 = sphi 0, %s118
      %s135 = sphi 0, %s119
      %s141 = sphi 0, %s143
      %s144 = sphi 0, %s141
      %s145 = sphi 0, %s144
      %s161 = sphi 0, %s145
      %s165 = sphi 0, %s165
      %s167 = sphi 0, %s165
      %s168 = sphi 0, %s167
      %s182 = sphi 0, %s168
      %s186 = sphi 0, %s186
      %s188 = sphi 0, %s186
      %s189 = sphi 0, %s188
      %s203 = sphi 0, %s189
      %s207 = sphi 0, %s207
      %s209 = sphi 0, %s207
      %s210 = sphi 0, %s209
      %s224 = sphi 0, %s210
      %s228 = sphi 0, %s228
      %s230 = sphi 0, %s228
      %s231 = sphi 0, %s230
      %s245 = sphi 0, %s231
      %s249 = sphi 0, %s249
      %s251 = sphi 0, %s249
      %s252 = sphi 0, %s251
      %s266 = sphi 0, %s252
      %s270 = sphi 0, %s270
      %s272 = sphi 0, %s270
      %s273 = sphi 0, %s272
      %s287 = sphi 0, %s273
      %s291 = sphi 0, %s291
      %s293 = sphi 0, %s291
      %s294 = sphi 0, %s293
      %s308 = sphi 0, %s294
      %s312 = sphi 0, %s312
      %s314 = sphi 0, %s312
      %s315 = sphi 0, %s314
      %s329 = sphi 0, %s315
      %s333 = sphi 0, %s333
      %s335 = sphi 0, %s333
      %s336 = sphi 0, %s335
      %s350 = sphi 0, %s336
      %s354 = sphi 0, %s354
      %s356 = sphi 0, %s354
      %s357 = sphi 0, %s356
      %s371 = sphi 0, %s357
      %s379 = sphi 0, %s381
      %s382 = sphi 0, %s379
      %s383 = sphi 0, %s382
      %s399 = sphi 0, %s383
    $region4: #{tpu_custom_call.1} parent=1 // loop_header_branch
      %40 = sbr.rel (%p38) target = $region8
    $region5: #{tpu_custom_call.1} parent=1 // loop_body
      %s42 = ssub.s32 %s37, 1
      %s43 = ssub.s32 %s37, 2
      %s50 = sadd.s32 1, %s45
      %p51 = scmp.ge.s32.totalorder %s50, 1
      %s52 = scalar_select %p51, 0, %s50
      %s53 = sadd.s32 1, %s44
      %s54 = scalar_select %p51, %s53, %s44
      %p55 = scmp.ge.s32.totalorder %s54, 2
      %s56 = scalar_select %p55, 0, %s54
      %s57 = ssub.s32 %s44, %s56
      %s58 = ssub.s32 %s45, %s52
      %s59 = sor.u32 %s57, %s58
      %p60 = scmp.eq.s32.totalorder %s59, 0
      %s62 = sadd.s32 %s61, 1
      %s63 = scalar_select %p60, %s61, %s62
      %p66 = pneg %p60
      %p67 = scmp.eq.s32.totalorder %s37, 1
      %p68 = por %p66, %p67
      %p69 = scmp.ne.s32.totalorder %s61, %s64
      %p70 = scmp.eq.s32.totalorder %s37, 0
      %p71 = por %p69, %p70
      %p72 = scmp.ne.s32.totalorder %s61, %s64
      %p73 = scmp.eq.s32.totalorder %s42, 1
      %p74 = por %p72, %p73
      %p75 = scmp.ne.s32.totalorder %s64, %s65
      %p76 = scmp.eq.s32.totalorder %s42, 0
      %p77 = por %p75, %p76
      %p78 = scmp.ne.s32.totalorder %s64, %s65
      %p79 = scmp.eq.s32.totalorder %s43, 1
      %p80 = por %p78, %p79
      %p82 = scmp.ne.s32.totalorder %s65, %s81
      %p83 = scmp.eq.s32.totalorder %s43, 0
      %p84 = por %p82, %p83
      %s85 = ssub.s32 %s44, %s56
      %s86 = ssub.s32 %s45, %s52
      %s87 = sor.u32 %s85, %s86
      %p88 = scmp.eq.s32.totalorder %s87, 0
      %s90 = sadd.s32 %s89, 1
      %s91 = scalar_select %p88, %s89, %s90
      %p94 = pneg %p88
      %p95 = scmp.eq.s32.totalorder %s37, 1
      %p96 = por %p94, %p95
      %p97 = scmp.ne.s32.totalorder %s89, %s92
      %p98 = scmp.eq.s32.totalorder %s37, 0
      %p99 = por %p97, %p98
      %p100 = scmp.ne.s32.totalorder %s89, %s92
      %p101 = scmp.eq.s32.totalorder %s42, 1
      %p102 = por %p100, %p101
      %p103 = scmp.ne.s32.totalorder %s92, %s93
      %p104 = scmp.eq.s32.totalorder %s42, 0
      %p105 = por %p103, %p104
      %p106 = scmp.ne.s32.totalorder %s92, %s93
      %p107 = scmp.eq.s32.totalorder %s43, 1
      %p108 = por %p106, %p107
      %p110 = scmp.ne.s32.totalorder %s93, %s109
      %p111 = scmp.eq.s32.totalorder %s43, 0
      %p112 = por %p110, %p111
      %s113 = ssub.s32 %s44, %s56
      %p114 = scmp.eq.s32.totalorder %s113, 0
      %s116 = sadd.s32 %s115, 1
      %s117 = scalar_select %p114, %s115, %s116
      %p120 = pneg %p114
      %p121 = scmp.eq.s32.totalorder %s37, 1
      %p122 = por %p120, %p121
      %p123 = scmp.ne.s32.totalorder %s115, %s118
      %p124 = scmp.eq.s32.totalorder %s37, 0
      %p125 = por %p123, %p124
      %p126 = scmp.ne.s32.totalorder %s115, %s118
      %p127 = scmp.eq.s32.totalorder %s42, 1
      %p128 = por %p126, %p127
      %p129 = scmp.ne.s32.totalorder %s118, %s119
      %p130 = scmp.eq.s32.totalorder %s42, 0
      %p131 = por %p129, %p130
      %p132 = scmp.ne.s32.totalorder %s118, %s119
      %p133 = scmp.eq.s32.totalorder %s43, 1
      %p134 = por %p132, %p133
      %p136 = scmp.ne.s32.totalorder %s119, %s135
      %p137 = scmp.eq.s32.totalorder %s43, 0
      %p138 = por %p136, %p137
      %s139 = ssub.s32 %s44, %s56
      %p140 = scmp.eq.s32.totalorder %s139, 0
      %s142 = sadd.s32 %s141, 1
      %s143 = scalar_select %p140, %s141, %s142
      %p146 = pneg %p140
      %p147 = scmp.eq.s32.totalorder %s37, 1
      %p148 = por %p146, %p147
      %p149 = scmp.ne.s32.totalorder %s141, %s144
      %p150 = scmp.eq.s32.totalorder %s37, 0
      %p151 = por %p149, %p150
      %p152 = scmp.ne.s32.totalorder %s141, %s144
      %p153 = scmp.eq.s32.totalorder %s42, 1
      %p154 = por %p152, %p153
      %p155 = scmp.ne.s32.totalorder %s144, %s145
      %p156 = scmp.eq.s32.totalorder %s42, 0
      %p157 = por %p155, %p156
      %p158 = scmp.ne.s32.totalorder %s144, %s145
      %p159 = scmp.eq.s32.totalorder %s43, 1
      %p160 = por %p158, %p159
      %p162 = scmp.ne.s32.totalorder %s145, %s161
      %p163 = scmp.eq.s32.totalorder %s43, 0
      %p164 = por %p162, %p163
      %s166 = sadd.s32 %s165, 1
      %p169 = scmp.eq.s32.totalorder %s37, 1
      %p170 = scmp.ne.s32.totalorder %s165, %s167
      %p171 = scmp.eq.s32.totalorder %s37, 0
      %p172 = por %p170, %p171
      %p173 = scmp.ne.s32.totalorder %s165, %s167
      %p174 = scmp.eq.s32.totalorder %s42, 1
      %p175 = por %p173, %p174
      %p176 = scmp.ne.s32.totalorder %s167, %s168
      %p177 = scmp.eq.s32.totalorder %s42, 0
      %p178 = por %p176, %p177
      %p179 = scmp.ne.s32.totalorder %s167, %s168
      %p180 = scmp.eq.s32.totalorder %s43, 1
      %p181 = por %p179, %p180
      %p183 = scmp.ne.s32.totalorder %s168, %s182
      %p184 = scmp.eq.s32.totalorder %s43, 0
      %p185 = por %p183, %p184
      %s187 = sadd.s32 %s186, 1
      %p190 = scmp.eq.s32.totalorder %s37, 1
      %p191 = scmp.ne.s32.totalorder %s186, %s188
      %p192 = scmp.eq.s32.totalorder %s37, 0
      %p193 = por %p191, %p192
      %p194 = scmp.ne.s32.totalorder %s186, %s188
      %p195 = scmp.eq.s32.totalorder %s42, 1
      %p196 = por %p194, %p195
      %p197 = scmp.ne.s32.totalorder %s188, %s189
      %p198 = scmp.eq.s32.totalorder %s42, 0
      %p199 = por %p197, %p198
      %p200 = scmp.ne.s32.totalorder %s188, %s189
      %p201 = scmp.eq.s32.totalorder %s43, 1
      %p202 = por %p200, %p201
      %p204 = scmp.ne.s32.totalorder %s189, %s203
      %p205 = scmp.eq.s32.totalorder %s43, 0
      %p206 = por %p204, %p205
      %s208 = sadd.s32 %s207, 1
      %p211 = scmp.eq.s32.totalorder %s37, 1
      %p212 = scmp.ne.s32.totalorder %s207, %s209
      %p213 = scmp.eq.s32.totalorder %s37, 0
      %p214 = por %p212, %p213
      %p215 = scmp.ne.s32.totalorder %s207, %s209
      %p216 = scmp.eq.s32.totalorder %s42, 1
      %p217 = por %p215, %p216
      %p218 = scmp.ne.s32.totalorder %s209, %s210
      %p219 = scmp.eq.s32.totalorder %s42, 0
      %p220 = por %p218, %p219
      %p221 = scmp.ne.s32.totalorder %s209, %s210
      %p222 = scmp.eq.s32.totalorder %s43, 1
      %p223 = por %p221, %p222
      %p225 = scmp.ne.s32.totalorder %s210, %s224
      %p226 = scmp.eq.s32.totalorder %s43, 0
      %p227 = por %p225, %p226
      %s229 = sadd.s32 %s228, 1
      %p232 = scmp.eq.s32.totalorder %s37, 1
      %p233 = scmp.ne.s32.totalorder %s228, %s230
      %p234 = scmp.eq.s32.totalorder %s37, 0
      %p235 = por %p233, %p234
      %p236 = scmp.ne.s32.totalorder %s228, %s230
      %p237 = scmp.eq.s32.totalorder %s42, 1
      %p238 = por %p236, %p237
      %p239 = scmp.ne.s32.totalorder %s230, %s231
      %p240 = scmp.eq.s32.totalorder %s42, 0
      %p241 = por %p239, %p240
      %p242 = scmp.ne.s32.totalorder %s230, %s231
      %p243 = scmp.eq.s32.totalorder %s43, 1
      %p244 = por %p242, %p243
      %p246 = scmp.ne.s32.totalorder %s231, %s245
      %p247 = scmp.eq.s32.totalorder %s43, 0
      %p248 = por %p246, %p247
      %s250 = sadd.s32 %s249, 1
      %p253 = scmp.eq.s32.totalorder %s37, 1
      %p254 = scmp.ne.s32.totalorder %s249, %s251
      %p255 = scmp.eq.s32.totalorder %s37, 0
      %p256 = por %p254, %p255
      %p257 = scmp.ne.s32.totalorder %s249, %s251
      %p258 = scmp.eq.s32.totalorder %s42, 1
      %p259 = por %p257, %p258
      %p260 = scmp.ne.s32.totalorder %s251, %s252
      %p261 = scmp.eq.s32.totalorder %s42, 0
      %p262 = por %p260, %p261
      %p263 = scmp.ne.s32.totalorder %s251, %s252
      %p264 = scmp.eq.s32.totalorder %s43, 1
      %p265 = por %p263, %p264
      %p267 = scmp.ne.s32.totalorder %s252, %s266
      %p268 = scmp.eq.s32.totalorder %s43, 0
      %p269 = por %p267, %p268
      %s271 = sadd.s32 %s270, 1
      %p274 = scmp.eq.s32.totalorder %s37, 1
      %p275 = scmp.ne.s32.totalorder %s270, %s272
      %p276 = scmp.eq.s32.totalorder %s37, 0
      %p277 = por %p275, %p276
      %p278 = scmp.ne.s32.totalorder %s270, %s272
      %p279 = scmp.eq.s32.totalorder %s42, 1
      %p280 = por %p278, %p279
      %p281 = scmp.ne.s32.totalorder %s272, %s273
      %p282 = scmp.eq.s32.totalorder %s42, 0
      %p283 = por %p281, %p282
      %p284 = scmp.ne.s32.totalorder %s272, %s273
      %p285 = scmp.eq.s32.totalorder %s43, 1
      %p286 = por %p284, %p285
      %p288 = scmp.ne.s32.totalorder %s273, %s287
      %p289 = scmp.eq.s32.totalorder %s43, 0
      %p290 = por %p288, %p289
      %s292 = sadd.s32 %s291, 1
      %p295 = scmp.eq.s32.totalorder %s37, 1
      %p296 = scmp.ne.s32.totalorder %s291, %s293
      %p297 = scmp.eq.s32.totalorder %s37, 0
      %p298 = por %p296, %p297
      %p299 = scmp.ne.s32.totalorder %s291, %s293
      %p300 = scmp.eq.s32.totalorder %s42, 1
      %p301 = por %p299, %p300
      %p302 = scmp.ne.s32.totalorder %s293, %s294
      %p303 = scmp.eq.s32.totalorder %s42, 0
      %p304 = por %p302, %p303
      %p305 = scmp.ne.s32.totalorder %s293, %s294
      %p306 = scmp.eq.s32.totalorder %s43, 1
      %p307 = por %p305, %p306
      %p309 = scmp.ne.s32.totalorder %s294, %s308
      %p310 = scmp.eq.s32.totalorder %s43, 0
      %p311 = por %p309, %p310
      %s313 = sadd.s32 %s312, 1
      %p316 = scmp.eq.s32.totalorder %s37, 1
      %p317 = scmp.ne.s32.totalorder %s312, %s314
      %p318 = scmp.eq.s32.totalorder %s37, 0
      %p319 = por %p317, %p318
      %p320 = scmp.ne.s32.totalorder %s312, %s314
      %p321 = scmp.eq.s32.totalorder %s42, 1
      %p322 = por %p320, %p321
      %p323 = scmp.ne.s32.totalorder %s314, %s315
      %p324 = scmp.eq.s32.totalorder %s42, 0
      %p325 = por %p323, %p324
      %p326 = scmp.ne.s32.totalorder %s314, %s315
      %p327 = scmp.eq.s32.totalorder %s43, 1
      %p328 = por %p326, %p327
      %p330 = scmp.ne.s32.totalorder %s315, %s329
      %p331 = scmp.eq.s32.totalorder %s43, 0
      %p332 = por %p330, %p331
      %s334 = sadd.s32 %s333, 1
      %p337 = scmp.eq.s32.totalorder %s37, 1
      %p338 = scmp.ne.s32.totalorder %s333, %s335
      %p339 = scmp.eq.s32.totalorder %s37, 0
      %p340 = por %p338, %p339
      %p341 = scmp.ne.s32.totalorder %s333, %s335
      %p342 = scmp.eq.s32.totalorder %s42, 1
      %p343 = por %p341, %p342
      %p344 = scmp.ne.s32.totalorder %s335, %s336
      %p345 = scmp.eq.s32.totalorder %s42, 0
      %p346 = por %p344, %p345
      %p347 = scmp.ne.s32.totalorder %s335, %s336
      %p348 = scmp.eq.s32.totalorder %s43, 1
      %p349 = por %p347, %p348
      %p351 = scmp.ne.s32.totalorder %s336, %s350
      %p352 = scmp.eq.s32.totalorder %s43, 0
      %p353 = por %p351, %p352
      %s355 = sadd.s32 %s354, 1
      %p358 = scmp.eq.s32.totalorder %s37, 1
      %p359 = scmp.ne.s32.totalorder %s354, %s356
      %p360 = scmp.eq.s32.totalorder %s37, 0
      %p361 = por %p359, %p360
      %p362 = scmp.ne.s32.totalorder %s354, %s356
      %p363 = scmp.eq.s32.totalorder %s42, 1
      %p364 = por %p362, %p363
      %p365 = scmp.ne.s32.totalorder %s356, %s357
      %p366 = scmp.eq.s32.totalorder %s42, 0
      %p367 = por %p365, %p366
      %p368 = scmp.ne.s32.totalorder %s356, %s357
      %p369 = scmp.eq.s32.totalorder %s43, 1
      %p370 = por %p368, %p369
      %p372 = scmp.ne.s32.totalorder %s357, %s371
      %p373 = scmp.eq.s32.totalorder %s43, 0
      %p374 = por %p372, %p373
      %s375 = ssub.s32 %s44, %s56
      %s376 = ssub.s32 %s45, %s52
      %s377 = sor.u32 %s375, %s376
      %p378 = scmp.eq.s32.totalorder %s377, 0
      %s380 = sadd.s32 %s379, 1
      %s381 = scalar_select %p378, %s379, %s380
      %p384 = pneg %p378
      %p385 = scmp.eq.s32.totalorder %s37, 1
      %p386 = por %p384, %p385
      %p387 = scmp.ne.s32.totalorder %s379, %s382
      %p388 = scmp.eq.s32.totalorder %s37, 0
      %p389 = por %p387, %p388
      %p390 = scmp.ne.s32.totalorder %s379, %s382
      %p391 = scmp.eq.s32.totalorder %s42, 1
      %p392 = por %p390, %p391
      %p393 = scmp.ne.s32.totalorder %s382, %s383
      %p394 = scmp.eq.s32.totalorder %s42, 0
      %p395 = por %p393, %p394
      %p396 = scmp.ne.s32.totalorder %s382, %s383
      %p397 = scmp.eq.s32.totalorder %s43, 1
      %p398 = por %p396, %p397
      %p400 = scmp.ne.s32.totalorder %s383, %s399
      %p401 = scmp.eq.s32.totalorder %s43, 0
      %p402 = por %p400, %p401
      %p403 = scmp.le.s32.totalorder 1, %s37
      %p404 = scmp.lt.s32.totalorder %s37, 3
      %p405 = pnand %p403, %p404
      %p406 = pneg %p405
      // Predicated region
      $region9: #{tpu_custom_call.1} parent=5 // pred_check
        _
      $region10: #{tpu_custom_call.1} parent=5 // pred_check_branch
        %408 = sbr.rel (%p405) target = $region12
      $region11: #{tpu_custom_call.1} parent=5 // pred_region
        %s409 = ssub.s32 %s37, 1
        // Predicated region
        $region13: #{tpu_custom_call.1} parent=11 // pred_check
          %p410 = pneg %p178
        $region14: #{tpu_custom_call.1} parent=11 // pred_check_branch
          %412 = sbr.rel (%p410) target = $region16
        $region15: #{tpu_custom_call.1} parent=11 // pred_region
          %s414 = ssub.s32 256, 256
          %415 = vsyncadd [#allocation9], %s414
          %s416 = sshll.u32 [#allocation10], 4
          %s417 = int_to_ptr.vmem [resolvable:$true] %s416
          %422 = dma.hbm_to_vmem [thread:$0]  %s4, 256, %s417, [#allocation9], 64, 64, 4
        $region16: #{tpu_custom_call.1} parent=11 // pred_fallthru
          _
        // Predicated region
        $region17: #{tpu_custom_call.1} parent=11 // pred_check
          %p423 = pneg %p199
        $region18: #{tpu_custom_call.1} parent=11 // pred_check_branch
          %425 = sbr.rel (%p423) target = $region20
        $region19: #{tpu_custom_call.1} parent=11 // pred_region
          %s427 = ssub.s32 16, 16
          %428 = vsyncadd [#allocation12], %s427
          %s430 = sshll.u32 [#allocation11], 4
          %s431 = int_to_ptr.vmem [resolvable:$true] %s430
          %433 = dma.hbm_to_vmem [thread:$0]  %s5, 16, %s431, [#allocation12]
        $region20: #{tpu_custom_call.1} parent=11 // pred_fallthru
          _
        // Predicated region
        $region21: #{tpu_custom_call.1} parent=11 // pred_check
          %p434 = pneg %p220
        $region22: #{tpu_custom_call.1} parent=11 // pred_check_branch
          %436 = sbr.rel (%p434) target = $region24
        $region23: #{tpu_custom_call.1} parent=11 // pred_region
          %s438 = ssub.s32 256, 256
          %439 = vsyncadd [#allocation12], %s438
          %s440 = sshll.u32 [#allocation13], 4
          %s441 = int_to_ptr.vmem [resolvable:$true] %s440
          %446 = dma.hbm_to_vmem [thread:$0]  %s6, 256, %s441, [#allocation12], 64, 64, 4
        $region24: #{tpu_custom_call.1} parent=11 // pred_fallthru
          _
        // Predicated region
        $region25: #{tpu_custom_call.1} parent=11 // pred_check
          %p447 = pneg %p241
        $region26: #{tpu_custom_call.1} parent=11 // pred_check_branch
          %449 = sbr.rel (%p447) target = $region28
        $region27: #{tpu_custom_call.1} parent=11 // pred_region
          %s451 = ssub.s32 16, 16
          %452 = vsyncadd [#allocation15], %s451
          %s454 = sshll.u32 [#allocation14], 4
          %s455 = int_to_ptr.vmem [resolvable:$true] %s454
          %457 = dma.hbm_to_vmem [thread:$0]  %s7, 16, %s455, [#allocation15]
        $region28: #{tpu_custom_call.1} parent=11 // pred_fallthru
          _
        // Predicated region
        $region29: #{tpu_custom_call.1} parent=11 // pred_check
          %p458 = pneg %p262
        $region30: #{tpu_custom_call.1} parent=11 // pred_check_branch
          %460 = sbr.rel (%p458) target = $region32
        $region31: #{tpu_custom_call.1} parent=11 // pred_region
          %s462 = ssub.s32 256, 256
          %463 = vsyncadd [#allocation15], %s462
          %s464 = sshll.u32 [#allocation16], 4
          %s465 = int_to_ptr.vmem [resolvable:$true] %s464
          %470 = dma.hbm_to_vmem [thread:$0]  %s8, 256, %s465, [#allocation15], 64, 64, 4
        $region32: #{tpu_custom_call.1} parent=11 // pred_fallthru
          _
        // Predicated region
        $region33: #{tpu_custom_call.1} parent=11 // pred_check
          %p471 = pneg %p283
        $region34: #{tpu_custom_call.1} parent=11 // pred_check_branch
          %473 = sbr.rel (%p471) target = $region36
        $region35: #{tpu_custom_call.1} parent=11 // pred_region
          %s475 = ssub.s32 16, 16
          %476 = vsyncadd [#allocation18], %s475
          %s478 = sshll.u32 [#allocation17], 4
          %s479 = int_to_ptr.vmem [resolvable:$true] %s478
          %481 = dma.hbm_to_vmem [thread:$0]  %s9, 16, %s479, [#allocation18]
        $region36: #{tpu_custom_call.1} parent=11 // pred_fallthru
          _
        // Predicated region
        $region37: #{tpu_custom_call.1} parent=11 // pred_check
          %p482 = pneg %p304
        $region38: #{tpu_custom_call.1} parent=11 // pred_check_branch
          %484 = sbr.rel (%p482) target = $region40
        $region39: #{tpu_custom_call.1} parent=11 // pred_region
          %s486 = ssub.s32 256, 256
          %487 = vsyncadd [#allocation18], %s486
          %s488 = sshll.u32 [#allocation19], 4
          %s489 = int_to_ptr.vmem [resolvable:$true] %s488
          %494 = dma.hbm_to_vmem [thread:$0]  %s10, 256, %s489, [#allocation18], 64, 64, 4
        $region40: #{tpu_custom_call.1} parent=11 // pred_fallthru
          _
        // Predicated region
        $region41: #{tpu_custom_call.1} parent=11 // pred_check
          %p495 = pneg %p325
        $region42: #{tpu_custom_call.1} parent=11 // pred_check_branch
          %497 = sbr.rel (%p495) target = $region44
        $region43: #{tpu_custom_call.1} parent=11 // pred_region
          %s499 = ssub.s32 16, 16
          %500 = vsyncadd [#allocation21], %s499
          %s502 = sshll.u32 [#allocation20], 4
          %s503 = int_to_ptr.vmem [resolvable:$true] %s502
          %505 = dma.hbm_to_vmem [thread:$0]  %s11, 16, %s503, [#allocation21]
        $region44: #{tpu_custom_call.1} parent=11 // pred_fallthru
          _
        // Predicated region
        $region45: #{tpu_custom_call.1} parent=11 // pred_check
          %p506 = pneg %p346
        $region46: #{tpu_custom_call.1} parent=11 // pred_check_branch
          %508 = sbr.rel (%p506) target = $region48
        $region47: #{tpu_custom_call.1} parent=11 // pred_region
          %s510 = ssub.s32 16, 16
          %511 = vsyncadd [#allocation21], %s510
          %s513 = sshll.u32 [#allocation22], 4
          %s514 = int_to_ptr.vmem [resolvable:$true] %s513
          %516 = dma.hbm_to_vmem [thread:$0]  %s12, 16, %s514, [#allocation21]
        $region48: #{tpu_custom_call.1} parent=11 // pred_fallthru
          _
        // Predicated region
        $region49: #{tpu_custom_call.1} parent=11 // pred_check
          %p517 = pneg %p367
        $region50: #{tpu_custom_call.1} parent=11 // pred_check_branch
          %519 = sbr.rel (%p517) target = $region52
        $region51: #{tpu_custom_call.1} parent=11 // pred_region
          %s521 = ssub.s32 16, 16
          %522 = vsyncadd [#allocation24], %s521
          %s524 = sshll.u32 [#allocation23], 4
          %s525 = int_to_ptr.vmem [resolvable:$true] %s524
          %527 = dma.hbm_to_vmem [thread:$0]  %s13, 16, %s525, [#allocation24]
        $region52: #{tpu_custom_call.1} parent=11 // pred_fallthru
          _
      $region12: #{tpu_custom_call.1} parent=5 // pred_fallthru
        _
      %p528 = scmp.lt.s32.totalorder %s37, 2
      // Predicated region
      $region53: #{tpu_custom_call.1} parent=5 // pred_check
        %p529 = pneg %p528
      $region54: #{tpu_custom_call.1} parent=5 // pred_check_branch
        %531 = sbr.rel (%p529) target = $region56
      $region55: #{tpu_custom_call.1} parent=5 // pred_region
        // Predicated region
        $region57: #{tpu_custom_call.1} parent=55 // pred_check
          %p532 = pneg %p71
        $region58: #{tpu_custom_call.1} parent=55 // pred_check_branch
          %534 = sbr.rel (%p532) target = $region60
        $region59: #{tpu_custom_call.1} parent=55 // pred_region
          %s535 = sand.u32 %s61, 1
          %s536 = scalar_lea.sflag [#allocation3], %s535
          %s537 = sand.u32 %s61, 1
          %s538 = smul.addr %s537, 8
          %s539 = scalar_lea.vmem [#allocation2], %s538
          %s541 = ssub.s32 128, 128
          %542 = vsyncadd %s536, %s541
          %s543 = sadd.s32 %s45, %s44
          %s544 = smul.addr %s543, 128
          %s545 = scalar_lea.hbm %s0, %s544
          %s547 = sshll.u32 %s539, 4
          %s548 = int_to_ptr.vmem [resolvable:$true] %s547
          %550 = dma.hbm_to_vmem [thread:$0]  %s545, 128, %s548, %s536
        $region60: #{tpu_custom_call.1} parent=55 // pred_fallthru
          _
        // Predicated region
        $region61: #{tpu_custom_call.1} parent=55 // pred_check
          %p551 = pneg %p99
        $region62: #{tpu_custom_call.1} parent=55 // pred_check_branch
          %553 = sbr.rel (%p551) target = $region64
        $region63: #{tpu_custom_call.1} parent=55 // pred_region
          %s554 = sand.u32 %s37, 1
          %s555 = scalar_lea.sflag [#allocation6], %s554
          %s556 = sand.u32 %s89, 1
          %s557 = smul.addr %s556, 8
          %s558 = scalar_lea.vmem [#allocation5], %s557
          %s560 = ssub.s32 128, 128
          %561 = vsyncadd %s555, %s560
          %s562 = sadd.s32 %s45, %s44
          %s563 = smul.addr %s562, 128
          %s564 = scalar_lea.hbm %s1, %s563
          %s566 = sshll.u32 %s558, 4
          %s567 = int_to_ptr.vmem [resolvable:$true] %s566
          %569 = dma.hbm_to_vmem [thread:$0]  %s564, 128, %s567, %s555
        $region64: #{tpu_custom_call.1} parent=55 // pred_fallthru
          _
        // Predicated region
        $region65: #{tpu_custom_call.1} parent=55 // pred_check
          %p570 = pneg %p125
        $region66: #{tpu_custom_call.1} parent=55 // pred_check_branch
          %572 = sbr.rel (%p570) target = $region68
        $region67: #{tpu_custom_call.1} parent=55 // pred_region
          %s573 = sand.u32 %s37, 1
          %s574 = scalar_lea.sflag [#allocation6], %s573
          %s575 = sand.u32 %s115, 1
          %s576 = smul.addr %s575, 8
          %s577 = scalar_lea.vmem [#allocation7], %s576
          %s579 = ssub.s32 128, 128
          %580 = vsyncadd %s574, %s579
          %s581 = smul.addr %s44, 128
          %s582 = scalar_lea.hbm %s2, %s581
          %s584 = sshll.u32 %s577, 4
          %s585 = int_to_ptr.vmem [resolvable:$true] %s584
          %587 = dma.hbm_to_vmem [thread:$0]  %s582, 128, %s585, %s574
        $region68: #{tpu_custom_call.1} parent=55 // pred_fallthru
          _
        // Predicated region
        $region69: #{tpu_custom_call.1} parent=55 // pred_check
          %p588 = pneg %p151
        $region70: #{tpu_custom_call.1} parent=55 // pred_check_branch
          %590 = sbr.rel (%p588) target = $region72
        $region71: #{tpu_custom_call.1} parent=55 // pred_region
          %s591 = sand.u32 %s37, 1
          %s592 = scalar_lea.sflag [#allocation9], %s591
          %s593 = sand.u32 %s141, 1
          %s594 = smul.addr %s593, 8
          %s595 = scalar_lea.vmem [#allocation8], %s594
          %s597 = ssub.s32 128, 128
          %598 = vsyncadd %s592, %s597
          %s599 = smul.addr %s44, 128
          %s600 = scalar_lea.hbm %s3, %s599
          %s602 = sshll.u32 %s595, 4
          %s603 = int_to_ptr.vmem [resolvable:$true] %s602
          %605 = dma.hbm_to_vmem [thread:$0]  %s600, 128, %s603, %s592
        $region72: #{tpu_custom_call.1} parent=55 // pred_fallthru
          _
      $region56: #{tpu_custom_call.1} parent=5 // pred_fallthru
        _
      %p606 = scmp.le.s32.totalorder 1, %s37
      %p607 = scmp.lt.s32.totalorder %s37, 3
      %p608 = pnand %p606, %p607
      %p609 = pneg %p608
      // Predicated region
      $region73: #{tpu_custom_call.1} parent=5 // pred_check
        _
      $region74: #{tpu_custom_call.1} parent=5 // pred_check_branch
        %611 = sbr.rel (%p608) target = $region76
      $region75: #{tpu_custom_call.1} parent=5 // pred_region
        %s612 = ssub.s32 %s37, 1
        %s613 = sand.u32 %s64, 1
        %s614 = scalar_lea.sflag [#allocation3], %s613
        %s615 = sand.u32 %s64, 1
        %s616 = smul.addr %s615, 8
        %s617 = scalar_lea.vmem [#allocation2], %s616
        // Predicated region
        $region77: #{tpu_custom_call.1} parent=75 // pred_check
          %p618 = pneg %p77
        $region78: #{tpu_custom_call.1} parent=75 // pred_check_branch
          %620 = sbr.rel (%p618) target = $region80
        $region79: #{tpu_custom_call.1} parent=75 // pred_region
          %621 = dma.done %s614, 128
        $region80: #{tpu_custom_call.1} parent=75 // pred_fallthru
          _
        %s622 = sand.u32 %s42, 1
        %s623 = scalar_lea.sflag [#allocation6], %s622
        %s624 = sand.u32 %s92, 1
        %s625 = smul.addr %s624, 8
        %s626 = scalar_lea.vmem [#allocation5], %s625
        // Predicated region
        $region81: #{tpu_custom_call.1} parent=75 // pred_check
          %p627 = pneg %p105
        $region82: #{tpu_custom_call.1} parent=75 // pred_check_branch
          %629 = sbr.rel (%p627) target = $region84
        $region83: #{tpu_custom_call.1} parent=75 // pred_region
          %630 = dma.done %s623, 128
        $region84: #{tpu_custom_call.1} parent=75 // pred_fallthru
          _
        %s631 = sand.u32 %s42, 1
        %s632 = scalar_lea.sflag [#allocation6], %s631
        %s633 = sand.u32 %s118, 1
        %s634 = smul.addr %s633, 8
        %s635 = scalar_lea.vmem [#allocation7], %s634
        // Predicated region
        $region85: #{tpu_custom_call.1} parent=75 // pred_check
          %p636 = pneg %p131
        $region86: #{tpu_custom_call.1} parent=75 // pred_check_branch
          %638 = sbr.rel (%p636) target = $region88
        $region87: #{tpu_custom_call.1} parent=75 // pred_region
          %639 = dma.done %s632, 128
        $region88: #{tpu_custom_call.1} parent=75 // pred_fallthru
          _
        %s640 = sand.u32 %s42, 1
        %s641 = scalar_lea.sflag [#allocation9], %s640
        %s642 = sand.u32 %s144, 1
        %s643 = smul.addr %s642, 8
        %s644 = scalar_lea.vmem [#allocation8], %s643
        // Predicated region
        $region89: #{tpu_custom_call.1} parent=75 // pred_check
          %p645 = pneg %p157
        $region90: #{tpu_custom_call.1} parent=75 // pred_check_branch
          %647 = sbr.rel (%p645) target = $region92
        $region91: #{tpu_custom_call.1} parent=75 // pred_region
          %648 = dma.done %s641, 128
        $region92: #{tpu_custom_call.1} parent=75 // pred_fallthru
          _
        // Predicated region
        $region93: #{tpu_custom_call.1} parent=75 // pred_check
          %p649 = pneg %p178
        $region94: #{tpu_custom_call.1} parent=75 // pred_check_branch
          %651 = sbr.rel (%p649) target = $region96
        $region95: #{tpu_custom_call.1} parent=75 // pred_region
          %652 = dma.done [#allocation9], 256
        $region96: #{tpu_custom_call.1} parent=75 // pred_fallthru
          _
        // Predicated region
        $region97: #{tpu_custom_call.1} parent=75 // pred_check
          %p653 = pneg %p199
        $region98: #{tpu_custom_call.1} parent=75 // pred_check_branch
          %655 = sbr.rel (%p653) target = $region100
        $region99: #{tpu_custom_call.1} parent=75 // pred_region
          %656 = dma.done [#allocation12], 16
        $region100: #{tpu_custom_call.1} parent=75 // pred_fallthru
          _
        // Predicated region
        $region101: #{tpu_custom_call.1} parent=75 // pred_check
          %p657 = pneg %p220
        $region102: #{tpu_custom_call.1} parent=75 // pred_check_branch
          %659 = sbr.rel (%p657) target = $region104
        $region103: #{tpu_custom_call.1} parent=75 // pred_region
          %660 = dma.done [#allocation12], 256
        $region104: #{tpu_custom_call.1} parent=75 // pred_fallthru
          _
        // Predicated region
        $region105: #{tpu_custom_call.1} parent=75 // pred_check
          %p661 = pneg %p241
        $region106: #{tpu_custom_call.1} parent=75 // pred_check_branch
          %663 = sbr.rel (%p661) target = $region108
        $region107: #{tpu_custom_call.1} parent=75 // pred_region
          %664 = dma.done [#allocation15], 16
        $region108: #{tpu_custom_call.1} parent=75 // pred_fallthru
          _
        // Predicated region
        $region109: #{tpu_custom_call.1} parent=75 // pred_check
          %p665 = pneg %p262
        $region110: #{tpu_custom_call.1} parent=75 // pred_check_branch
          %667 = sbr.rel (%p665) target = $region112
        $region111: #{tpu_custom_call.1} parent=75 // pred_region
          %668 = dma.done [#allocation15], 256
        $region112: #{tpu_custom_call.1} parent=75 // pred_fallthru
          _
        // Predicated region
        $region113: #{tpu_custom_call.1} parent=75 // pred_check
          %p669 = pneg %p283
        $region114: #{tpu_custom_call.1} parent=75 // pred_check_branch
          %671 = sbr.rel (%p669) target = $region116
        $region115: #{tpu_custom_call.1} parent=75 // pred_region
          %672 = dma.done [#allocation18], 16
        $region116: #{tpu_custom_call.1} parent=75 // pred_fallthru
          _
        // Predicated region
        $region117: #{tpu_custom_call.1} parent=75 // pred_check
          %p673 = pneg %p304
        $region118: #{tpu_custom_call.1} parent=75 // pred_check_branch
          %675 = sbr.rel (%p673) target = $region120
        $region119: #{tpu_custom_call.1} parent=75 // pred_region
          %676 = dma.done [#allocation18], 256
        $region120: #{tpu_custom_call.1} parent=75 // pred_fallthru
          _
        // Predicated region
        $region121: #{tpu_custom_call.1} parent=75 // pred_check
          %p677 = pneg %p325
        $region122: #{tpu_custom_call.1} parent=75 // pred_check_branch
          %679 = sbr.rel (%p677) target = $region124
        $region123: #{tpu_custom_call.1} parent=75 // pred_region
          %680 = dma.done [#allocation21], 16
        $region124: #{tpu_custom_call.1} parent=75 // pred_fallthru
          _
        // Predicated region
        $region125: #{tpu_custom_call.1} parent=75 // pred_check
          %p681 = pneg %p346
        $region126: #{tpu_custom_call.1} parent=75 // pred_check_branch
          %683 = sbr.rel (%p681) target = $region128
        $region127: #{tpu_custom_call.1} parent=75 // pred_region
          %684 = dma.done [#allocation21], 16
        $region128: #{tpu_custom_call.1} parent=75 // pred_fallthru
          _
        // Predicated region
        $region129: #{tpu_custom_call.1} parent=75 // pred_check
          %p685 = pneg %p367
        $region130: #{tpu_custom_call.1} parent=75 // pred_check_branch
          %687 = sbr.rel (%p685) target = $region132
        $region131: #{tpu_custom_call.1} parent=75 // pred_region
          %688 = dma.done [#allocation24], 16
        $region132: #{tpu_custom_call.1} parent=75 // pred_fallthru
          _
        %s689 = sand.u32 %s64, 1
        %s690 = scalar_lea.sflag [#allocation3], %s689
        %s691 = sand.u32 %s64, 1
        %s692 = smul.addr %s691, 8
        %s693 = scalar_lea.vmem [#allocation2], %s692
        %p694 = pneg %p77
        %p695 = pneg %p74
        %s696 = sand.u32 %s42, 1
        %s697 = scalar_lea.sflag [#allocation6], %s696
        %s698 = sand.u32 %s92, 1
        %s699 = smul.addr %s698, 8
        %s700 = scalar_lea.vmem [#allocation5], %s699
        %p701 = pneg %p105
        %p702 = pneg %p102
        %s703 = sand.u32 %s42, 1
        %s704 = scalar_lea.sflag [#allocation6], %s703
        %s705 = sand.u32 %s118, 1
        %s706 = smul.addr %s705, 8
        %s707 = scalar_lea.vmem [#allocation7], %s706
        %p708 = pneg %p131
        %p709 = pneg %p128
        %s710 = sand.u32 %s42, 1
        %s711 = scalar_lea.sflag [#allocation9], %s710
        %s712 = sand.u32 %s144, 1
        %s713 = smul.addr %s712, 8
        %s714 = scalar_lea.vmem [#allocation8], %s713
        %p715 = pneg %p157
        %p716 = pneg %p154
        %p717 = pneg %p178
        %p718 = pneg %p175
        %p719 = pneg %p199
        %p720 = pneg %p196
        %p721 = pneg %p220
        %p722 = pneg %p217
        %p723 = pneg %p241
        %p724 = pneg %p238
        %p725 = pneg %p262
        %p726 = pneg %p259
        %p727 = pneg %p283
        %p728 = pneg %p280
        %p729 = pneg %p304
        %p730 = pneg %p301
        %p731 = pneg %p325
        %p732 = pneg %p322
        %p733 = pneg %p346
        %p734 = pneg %p343
        %p735 = pneg %p367
        %p736 = pneg %p364
        %p737 = pneg %p395
        %p738 = pneg %p392
        %s739 = sand.u32 %s382, 1
        %s740 = scalar_lea.sflag [#allocation4], %s739
        %s741 = sand.u32 %s382, 1
        %s742 = smul.addr %s741, 8
        %s743 = scalar_lea.vmem [#allocation25], %s742
        %v745 = vld [vmem:[%s617] sm:$0xff]
        %v746 = vld [vmem:[%s635] sm:$0xff]
        %v747 = vld [vmem:[%s626] sm:$0xff]
        %v748 = vadd.f32 %v745, %v747
        %v749 = vpack.c.bf16 %v748, %v748
        %v750 = vld [vmem:[%s644] sm:$0xff]
        %v751 = vadd.f32 %v746, %v750
        %v752 = vpack.c.bf16 %v751, %v751
        %v753 = vpack.c.bf16 %v746, %v746
        %v754 = vld [vmem:[#allocation10] sm:$0xf]
        %v755 = vld [vmem:[#allocation10 + $0x4] sm:$0xf]
        %v756 = vld [vmem:[#allocation10 + $0x8] sm:$0xf]
        %v757 = vld [vmem:[#allocation10 + $0xc] sm:$0xf]
        %v758 = vld [vmem:[#allocation11] sm:$0x1]
        %v760 = vlaneseq
        %v761 = vshrl.u32 %v760, 7
        %v762 = vsub.s32 0, %v761
        %v763 = vrot.slane %v758, %v762
        %v769 = vunpack.c.l.b16 %v754
        %v770 = vunpack.c.l.b16 %v755
        %v771 = vunpack.c.l.b16 %v756
        %v772 = vunpack.c.l.b16 %v757
        %v773 = vpack.c.b16 %v770, %v769
        %v774 = vpack.c.b16 %v772, %v771
        %vm777 = vcmask 261120
        %v779 = vsel %vm777, %v749, 0
        %781 = vmatprep.subr.bf16.mxu0 0
        %782 = vmatpush1.bf16.msra.mxu0 %v773
        %783 = vmatprep.subr.bf16.mxu0 0
        %784 = vmatpush1.bf16.msra.mxu0 %v774
        %785 = vmatprep.subr.bf16.mxu0 0
        %786 = vmatpush1.bf16.msra.mxu0 0
        %787 = vmatprep.subr.bf16.mxu0 0
        %788 = vmatpush1.bf16.msra.mxu0 0
        %789 = vmatprep.subr.bf16.mxu0 0
        %790 = vmatpush1.bf16.msra.mxu0 0
        %791 = vmatprep.subr.bf16.mxu0 0
        %792 = vmatpush1.bf16.msra.mxu0 0
        %793 = vmatprep.subr.bf16.mxu0 0
        %794 = vmatpush1.bf16.msra.mxu0 0
        %795 = vmatprep.subr.bf16.mxu0 0
        %796 = vmatpush1.bf16.msra.mxu0 0
        %797 = vmatprep.subr.bf16.mxu0 0
        %798 = vmatpush1.bf16.msra.mxu0 0
        %799 = vmatprep.subr.bf16.mxu0 0
        %800 = vmatpush1.bf16.msra.mxu0 0
        %801 = vmatprep.subr.bf16.mxu0 0
        %802 = vmatpush1.bf16.msra.mxu0 0
        %803 = vmatprep.subr.bf16.mxu0 0
        %804 = vmatpush1.bf16.msra.mxu0 0
        %805 = vmatprep.subr.bf16.mxu0 0
        %806 = vmatpush1.bf16.msra.mxu0 0
        %807 = vmatprep.subr.bf16.mxu0 0
        %808 = vmatpush1.bf16.msra.mxu0 0
        %809 = vmatprep.subr.bf16.mxu0 0
        %810 = vmatpush1.bf16.msra.mxu0 0
        %811 = vmatprep.subr.bf16.mxu0 0
        %812 = vmatpush1.bf16.msra.mxu0 0
        %813 = vmatprep.mubr.bf16.mxu0 0
        %814 = vmatmul.mubr.bf16.gmra.mrb[0].mxu0 %v779
        %v815 = vpop.f32.mrb[0].mxu0
        %v816 = vadd.f32 %v763, %v815
        %v817 = vpop.f32.mrb[0].mxu0
        %v818 = vpop.f32.mrb[0].mxu0
        %v819 = vpop.f32.mrb[0].mxu0
        %820 = vdwg.mxu0
        %v821 = vld [vmem:[#allocation13] sm:$0xf]
        %v822 = vld [vmem:[#allocation13 + $0x4] sm:$0xf]
        %v823 = vld [vmem:[#allocation13 + $0x8] sm:$0xf]
        %v824 = vld [vmem:[#allocation13 + $0xc] sm:$0xf]
        %v825 = vld [vmem:[#allocation14] sm:$0x1]
        %v827 = vlaneseq
        %v828 = vshrl.u32 %v827, 7
        %v829 = vsub.s32 0, %v828
        %v830 = vrot.slane %v825, %v829
        %v836 = vunpack.c.l.b16 %v821
        %v837 = vunpack.c.l.b16 %v822
        %v838 = vunpack.c.l.b16 %v823
        %v839 = vunpack.c.l.b16 %v824
        %v840 = vpack.c.b16 %v837, %v836
        %v841 = vpack.c.b16 %v839, %v838
        %v845 = vsel %vm777, %v752, 0
        %847 = vmatprep.subr.bf16.mxu0 0
        %848 = vmatpush1.bf16.msra.mxu0 %v840
        %849 = vmatprep.subr.bf16.mxu0 0
        %850 = vmatpush1.bf16.msra.mxu0 %v841
        %851 = vmatprep.subr.bf16.mxu0 0
        %852 = vmatpush1.bf16.msra.mxu0 0
        %853 = vmatprep.subr.bf16.mxu0 0
        %854 = vmatpush1.bf16.msra.mxu0 0
        %855 = vmatprep.subr.bf16.mxu0 0
        %856 = vmatpush1.bf16.msra.mxu0 0
        %857 = vmatprep.subr.bf16.mxu0 0
        %858 = vmatpush1.bf16.msra.mxu0 0
        %859 = vmatprep.subr.bf16.mxu0 0
        %860 = vmatpush1.bf16.msra.mxu0 0
        %861 = vmatprep.subr.bf16.mxu0 0
        %862 = vmatpush1.bf16.msra.mxu0 0
        %863 = vmatprep.subr.bf16.mxu0 0
        %864 = vmatpush1.bf16.msra.mxu0 0
        %865 = vmatprep.subr.bf16.mxu0 0
        %866 = vmatpush1.bf16.msra.mxu0 0
        %867 = vmatprep.subr.bf16.mxu0 0
        %868 = vmatpush1.bf16.msra.mxu0 0
        %869 = vmatprep.subr.bf16.mxu0 0
        %870 = vmatpush1.bf16.msra.mxu0 0
        %871 = vmatprep.subr.bf16.mxu0 0
        %872 = vmatpush1.bf16.msra.mxu0 0
        %873 = vmatprep.subr.bf16.mxu0 0
        %874 = vmatpush1.bf16.msra.mxu0 0
        %875 = vmatprep.subr.bf16.mxu0 0
        %876 = vmatpush1.bf16.msra.mxu0 0
        %877 = vmatprep.subr.bf16.mxu0 0
        %878 = vmatpush1.bf16.msra.mxu0 0
        %879 = vmatprep.mubr.bf16.mxu0 0
        %880 = vmatmul.mubr.bf16.gmra.mrb[0].mxu0 %v845
        %v881 = vpop.f32.mrb[0].mxu0
        %v882 = vadd.f32 %v830, %v881
        %v883 = vpop.f32.mrb[0].mxu0
        %v884 = vpop.f32.mrb[0].mxu0
        %v885 = vpop.f32.mrb[0].mxu0
        %886 = vdwg.mxu0
        %v887 = vld [vmem:[#allocation16] sm:$0xf]
        %v888 = vld [vmem:[#allocation16 + $0x4] sm:$0xf]
        %v889 = vld [vmem:[#allocation16 + $0x8] sm:$0xf]
        %v890 = vld [vmem:[#allocation16 + $0xc] sm:$0xf]
        %v891 = vld [vmem:[#allocation17] sm:$0x1]
        %v893 = vlaneseq
        %v894 = vshrl.u32 %v893, 7
        %v895 = vsub.s32 0, %v894
        %v896 = vrot.slane %v891, %v895
        %v902 = vunpack.c.l.b16 %v887
        %v903 = vunpack.c.l.b16 %v888
        %v904 = vunpack.c.l.b16 %v889
        %v905 = vunpack.c.l.b16 %v890
        %v906 = vpack.c.b16 %v903, %v902
        %v907 = vpack.c.b16 %v905, %v904
        %v911 = vsel %vm777, %v753, 0
        %913 = vmatprep.subr.bf16.mxu0 0
        %914 = vmatpush1.bf16.msra.mxu0 %v906
        %915 = vmatprep.subr.bf16.mxu0 0
        %916 = vmatpush1.bf16.msra.mxu0 %v907
        %917 = vmatprep.subr.bf16.mxu0 0
        %918 = vmatpush1.bf16.msra.mxu0 0
        %919 = vmatprep.subr.bf16.mxu0 0
        %920 = vmatpush1.bf16.msra.mxu0 0
        %921 = vmatprep.subr.bf16.mxu0 0
        %922 = vmatpush1.bf16.msra.mxu0 0
        %923 = vmatprep.subr.bf16.mxu0 0
        %924 = vmatpush1.bf16.msra.mxu0 0
        %925 = vmatprep.subr.bf16.mxu0 0
        %926 = vmatpush1.bf16.msra.mxu0 0
        %927 = vmatprep.subr.bf16.mxu0 0
        %928 = vmatpush1.bf16.msra.mxu0 0
        %929 = vmatprep.subr.bf16.mxu0 0
        %930 = vmatpush1.bf16.msra.mxu0 0
        %931 = vmatprep.subr.bf16.mxu0 0
        %932 = vmatpush1.bf16.msra.mxu0 0
        %933 = vmatprep.subr.bf16.mxu0 0
        %934 = vmatpush1.bf16.msra.mxu0 0
        %935 = vmatprep.subr.bf16.mxu0 0
        %936 = vmatpush1.bf16.msra.mxu0 0
        %937 = vmatprep.subr.bf16.mxu0 0
        %938 = vmatpush1.bf16.msra.mxu0 0
        %939 = vmatprep.subr.bf16.mxu0 0
        %940 = vmatpush1.bf16.msra.mxu0 0
        %941 = vmatprep.subr.bf16.mxu0 0
        %942 = vmatpush1.bf16.msra.mxu0 0
        %943 = vmatprep.subr.bf16.mxu0 0
        %944 = vmatpush1.bf16.msra.mxu0 0
        %945 = vmatprep.mubr.bf16.mxu0 0
        %946 = vmatmul.mubr.bf16.gmra.mrb[0].mxu0 %v911
        %v947 = vpop.f32.mrb[0].mxu0
        %v948 = vadd.f32 %v896, %v947
        %v949 = vpop.f32.mrb[0].mxu0
        %v950 = vpop.f32.mrb[0].mxu0
        %v951 = vpop.f32.mrb[0].mxu0
        %952 = vdwg.mxu0
        %v953 = vpack.c.bf16 %v816, %v816
        %v954 = vpack.c.bf16 %v882, %v882
        %vm955 = vcmask 64512
        %v957 = vsel %vm955, %v953, 0
        %v960 = vsel %vm955, %v954, 0
        %962 = vmatprep.subr.bf16.mxu0 0
        %963 = vmatpush1.bf16.xpose.msra.mxu0 %v960
        %964 = vmatprep.subr.bf16.mxu0 0
        %965 = vmatpush1.bf16.xpose.msra.mxu0 0
        %966 = vmatprep.subr.bf16.mxu0 0
        %967 = vmatpush1.bf16.xpose.msra.mxu0 0
        %968 = vmatprep.subr.bf16.mxu0 0
        %969 = vmatpush1.bf16.xpose.msra.mxu0 0
        %970 = vmatprep.subr.bf16.mxu0 0
        %971 = vmatpush1.bf16.xpose.msra.mxu0 0
        %972 = vmatprep.subr.bf16.mxu0 0
        %973 = vmatpush1.bf16.xpose.msra.mxu0 0
        %974 = vmatprep.subr.bf16.mxu0 0
        %975 = vmatpush1.bf16.xpose.msra.mxu0 0
        %976 = vmatprep.subr.bf16.mxu0 0
        %977 = vmatpush1.bf16.xpose.msra.mxu0 0
        %978 = vmatprep.subr.bf16.mxu0 0
        %979 = vmatpush1.bf16.xpose.msra.mxu0 0
        %980 = vmatprep.subr.bf16.mxu0 0
        %981 = vmatpush1.bf16.xpose.msra.mxu0 0
        %982 = vmatprep.subr.bf16.mxu0 0
        %983 = vmatpush1.bf16.xpose.msra.mxu0 0
        %984 = vmatprep.subr.bf16.mxu0 0
        %985 = vmatpush1.bf16.xpose.msra.mxu0 0
        %986 = vmatprep.subr.bf16.mxu0 0
        %987 = vmatpush1.bf16.xpose.msra.mxu0 0
        %988 = vmatprep.subr.bf16.mxu0 0
        %989 = vmatpush1.bf16.xpose.msra.mxu0 0
        %990 = vmatprep.subr.bf16.mxu0 0
        %991 = vmatpush1.bf16.xpose.msra.mxu0 0
        %992 = vmatprep.subr.bf16.mxu0 0
        %993 = vmatpush1.bf16.xpose.msra.mxu0 0
        %994 = vmatprep.mubr.bf16.mxu0 0
        %995 = vmatmul.mubr.bf16.gmra.mrb[0].mxu0 %v957
        %v996 = vpop.f32.mrb[0].mxu0
        %v997 = vadd.f32 0.0, %v996
        %v998 = vpop.f32.mrb[0].mxu0
        %v999 = vpop.f32.mrb[0].mxu0
        %v1000 = vpop.f32.mrb[0].mxu0
        %1001 = vdwg.mxu0
        %v1002 = vsel %vm955, %v997, -inf
        %1003 = vmax.xlane.f32.xlu0 %v1002
        %v1004 = vpop.xlane.xlu0 %1003
        %v1005 = vsub.f32 %v997, %v1004
        %v1006 = vmul.f32 %v1005, 1.442695
        %v1007 = vpow.pop %v1006
        %v1008 = vsel %vm955, %v1007, 0.0
        %1009 = vadd.xlane.f32.xlu0 %v1008
        %v1010 = vpop.xlane.xlu0 %1009
        %v1011 = vrcp.pop %v1010
        %v1012 = vmul.f32 %v1007, %v1011
        %v1013 = vpack.c.bf16 %v1012, %v1012
        %v1014 = vpack.c.bf16 %v948, %v948
        %v1016 = vsel %vm955, %v1013, 0
        %vm1018 = vcmask 1043456
        %v1020 = vsel %vm1018, %v1014, 0
        %1022 = vmatprep.subr.bf16.mxu0 0
        %1023 = vmatpush1.bf16.msra.mxu0 %v1020
        %1024 = vmatprep.subr.bf16.mxu0 0
        %1025 = vmatpush1.bf16.msra.mxu0 0
        %1026 = vmatprep.subr.bf16.mxu0 0
        %1027 = vmatpush1.bf16.msra.mxu0 0
        %1028 = vmatprep.subr.bf16.mxu0 0
        %1029 = vmatpush1.bf16.msra.mxu0 0
        %1030 = vmatprep.subr.bf16.mxu0 0
        %1031 = vmatpush1.bf16.msra.mxu0 0
        %1032 = vmatprep.subr.bf16.mxu0 0
        %1033 = vmatpush1.bf16.msra.mxu0 0
        %1034 = vmatprep.subr.bf16.mxu0 0
        %1035 = vmatpush1.bf16.msra.mxu0 0
        %1036 = vmatprep.subr.bf16.mxu0 0
        %1037 = vmatpush1.bf16.msra.mxu0 0
        %1038 = vmatprep.subr.bf16.mxu0 0
        %1039 = vmatpush1.bf16.msra.mxu0 0
        %1040 = vmatprep.subr.bf16.mxu0 0
        %1041 = vmatpush1.bf16.msra.mxu0 0
        %1042 = vmatprep.subr.bf16.mxu0 0
        %1043 = vmatpush1.bf16.msra.mxu0 0
        %1044 = vmatprep.subr.bf16.mxu0 0
        %1045 = vmatpush1.bf16.msra.mxu0 0
        %1046 = vmatprep.subr.bf16.mxu0 0
        %1047 = vmatpush1.bf16.msra.mxu0 0
        %1048 = vmatprep.subr.bf16.mxu0 0
        %1049 = vmatpush1.bf16.msra.mxu0 0
        %1050 = vmatprep.subr.bf16.mxu0 0
        %1051 = vmatpush1.bf16.msra.mxu0 0
        %1052 = vmatprep.subr.bf16.mxu0 0
        %1053 = vmatpush1.bf16.msra.mxu0 0
        %1054 = vmatprep.mubr.bf16.mxu0 0
        %1055 = vmatmul.mubr.bf16.gmra.mrb[0].mxu0 %v1016
        %v1056 = vpop.f32.mrb[0].mxu0
        %v1057 = vadd.f32 0.0, %v1056
        %v1058 = vpop.f32.mrb[0].mxu0
        %v1059 = vpop.f32.mrb[0].mxu0
        %v1060 = vpop.f32.mrb[0].mxu0
        %1061 = vdwg.mxu0
        %1063 = vrot.lane.b32.xlu0 %v953, 120
        %v1064 = vpop.permute.xlu0 %1063
        %1066 = vrot.lane.b32.xlu0 %v954, 120
        %v1067 = vpop.permute.xlu0 %1066
        %v1069 = vsel %vm955, %v1064, 0
        %v1072 = vsel %vm955, %v1067, 0
        %1074 = vmatprep.subr.bf16.mxu0 0
        %1075 = vmatpush1.bf16.xpose.msra.mxu0 %v1072
        %1076 = vmatprep.subr.bf16.mxu0 0
        %1077 = vmatpush1.bf16.xpose.msra.mxu0 0
        %1078 = vmatprep.subr.bf16.mxu0 0
        %1079 = vmatpush1.bf16.xpose.msra.mxu0 0
        %1080 = vmatprep.subr.bf16.mxu0 0
        %1081 = vmatpush1.bf16.xpose.msra.mxu0 0
        %1082 = vmatprep.subr.bf16.mxu0 0
        %1083 = vmatpush1.bf16.xpose.msra.mxu0 0
        %1084 = vmatprep.subr.bf16.mxu0 0
        %1085 = vmatpush1.bf16.xpose.msra.mxu0 0
        %1086 = vmatprep.subr.bf16.mxu0 0
        %1087 = vmatpush1.bf16.xpose.msra.mxu0 0
        %1088 = vmatprep.subr.bf16.mxu0 0
        %1089 = vmatpush1.bf16.xpose.msra.mxu0 0
        %1090 = vmatprep.subr.bf16.mxu0 0
        %1091 = vmatpush1.bf16.xpose.msra.mxu0 0
        %1092 = vmatprep.subr.bf16.mxu0 0
        %1093 = vmatpush1.bf16.xpose.msra.mxu0 0
        %1094 = vmatprep.subr.bf16.mxu0 0
        %1095 = vmatpush1.bf16.xpose.msra.mxu0 0
        %1096 = vmatprep.subr.bf16.mxu0 0
        %1097 = vmatpush1.bf16.xpose.msra.mxu0 0
        %1098 = vmatprep.subr.bf16.mxu0 0
        %1099 = vmatpush1.bf16.xpose.msra.mxu0 0
        %1100 = vmatprep.subr.bf16.mxu0 0
        %1101 = vmatpush1.bf16.xpose.msra.mxu0 0
        %1102 = vmatprep.subr.bf16.mxu0 0
        %1103 = vmatpush1.bf16.xpose.msra.mxu0 0
        %1104 = vmatprep.subr.bf16.mxu0 0
        %1105 = vmatpush1.bf16.xpose.msra.mxu0 0
        %1106 = vmatprep.mubr.bf16.mxu0 0
        %1107 = vmatmul.mubr.bf16.gmra.mrb[0].mxu0 %v1069
        %v1108 = vpop.f32.mrb[0].mxu0
        %v1109 = vadd.f32 0.0, %v1108
        %v1110 = vpop.f32.mrb[0].mxu0
        %v1111 = vpop.f32.mrb[0].mxu0
        %v1112 = vpop.f32.mrb[0].mxu0
        %1113 = vdwg.mxu0
        %v1114 = vsel %vm955, %v1109, -inf
        %1115 = vmax.xlane.f32.xlu0 %v1114
        %v1116 = vpop.xlane.xlu0 %1115
        %v1117 = vsub.f32 %v1109, %v1116
        %v1118 = vmul.f32 %v1117, 1.442695
        %v1119 = vpow.pop %v1118
        %v1120 = vsel %vm955, %v1119, 0.0
        %1121 = vadd.xlane.f32.xlu0 %v1120
        %v1122 = vpop.xlane.xlu0 %1121
        %v1123 = vrcp.pop %v1122
        %v1124 = vmul.f32 %v1119, %v1123
        %v1125 = vpack.c.bf16 %v1124, %v1124
        %1127 = vrot.lane.b32.xlu0 %v1014, 120
        %v1128 = vpop.permute.xlu0 %1127
        %v1130 = vsel %vm955, %v1125, 0
        %v1133 = vsel %vm1018, %v1128, 0
        %1135 = vmatprep.subr.bf16.mxu0 0
        %1136 = vmatpush1.bf16.msra.mxu0 %v1133
        %1137 = vmatprep.subr.bf16.mxu0 0
        %1138 = vmatpush1.bf16.msra.mxu0 0
        %1139 = vmatprep.subr.bf16.mxu0 0
        %1140 = vmatpush1.bf16.msra.mxu0 0
        %1141 = vmatprep.subr.bf16.mxu0 0
        %1142 = vmatpush1.bf16.msra.mxu0 0
        %1143 = vmatprep.subr.bf16.mxu0 0
        %1144 = vmatpush1.bf16.msra.mxu0 0
        %1145 = vmatprep.subr.bf16.mxu0 0
        %1146 = vmatpush1.bf16.msra.mxu0 0
        %1147 = vmatprep.subr.bf16.mxu0 0
        %1148 = vmatpush1.bf16.msra.mxu0 0
        %1149 = vmatprep.subr.bf16.mxu0 0
        %1150 = vmatpush1.bf16.msra.mxu0 0
        %1151 = vmatprep.subr.bf16.mxu0 0
        %1152 = vmatpush1.bf16.msra.mxu0 0
        %1153 = vmatprep.subr.bf16.mxu0 0
        %1154 = vmatpush1.bf16.msra.mxu0 0
        %1155 = vmatprep.subr.bf16.mxu0 0
        %1156 = vmatpush1.bf16.msra.mxu0 0
        %1157 = vmatprep.subr.bf16.mxu0 0
        %1158 = vmatpush1.bf16.msra.mxu0 0
        %1159 = vmatprep.subr.bf16.mxu0 0
        %1160 = vmatpush1.bf16.msra.mxu0 0
        %1161 = vmatprep.subr.bf16.mxu0 0
        %1162 = vmatpush1.bf16.msra.mxu0 0
        %1163 = vmatprep.subr.bf16.mxu0 0
        %1164 = vmatpush1.bf16.msra.mxu0 0
        %1165 = vmatprep.subr.bf16.mxu0 0
        %1166 = vmatpush1.bf16.msra.mxu0 0
        %1167 = vmatprep.mubr.bf16.mxu0 0
        %1168 = vmatmul.mubr.bf16.gmra.mrb[0].mxu0 %v1130
        %v1169 = vpop.f32.mrb[0].mxu0
        %v1170 = vadd.f32 0.0, %v1169
        %v1171 = vpop.f32.mrb[0].mxu0
        %v1172 = vpop.f32.mrb[0].mxu0
        %v1173 = vpop.f32.mrb[0].mxu0
        %1174 = vdwg.mxu0
        %1175 = vrot.lane.b32.xlu0 %v953, 112
        %v1176 = vpop.permute.xlu0 %1175
        %1177 = vrot.lane.b32.xlu0 %v954, 112
        %v1178 = vpop.permute.xlu0 %1177
        %v1180 = vsel %vm955, %v1176, 0
        %v1183 = vsel %vm955, %v1178, 0
        %1185 = vmatprep.subr.bf16.mxu0 0
        %1186 = vmatpush1.bf16.xpose.msra.mxu0 %v1183
        %1187 = vmatprep.subr.bf16.mxu0 0
        %1188 = vmatpush1.bf16.xpose.msra.mxu0 0
        %1189 = vmatprep.subr.bf16.mxu0 0
        %1190 = vmatpush1.bf16.xpose.msra.mxu0 0
        %1191 = vmatprep.subr.bf16.mxu0 0
        %1192 = vmatpush1.bf16.xpose.msra.mxu0 0
        %1193 = vmatprep.subr.bf16.mxu0 0
        %1194 = vmatpush1.bf16.xpose.msra.mxu0 0
        %1195 = vmatprep.subr.bf16.mxu0 0
        %1196 = vmatpush1.bf16.xpose.msra.mxu0 0
        %1197 = vmatprep.subr.bf16.mxu0 0
        %1198 = vmatpush1.bf16.xpose.msra.mxu0 0
        %1199 = vmatprep.subr.bf16.mxu0 0
        %1200 = vmatpush1.bf16.xpose.msra.mxu0 0
        %1201 = vmatprep.subr.bf16.mxu0 0
        %1202 = vmatpush1.bf16.xpose.msra.mxu0 0
        %1203 = vmatprep.subr.bf16.mxu0 0
        %1204 = vmatpush1.bf16.xpose.msra.mxu0 0
        %1205 = vmatprep.subr.bf16.mxu0 0
        %1206 = vmatpush1.bf16.xpose.msra.mxu0 0
        %1207 = vmatprep.subr.bf16.mxu0 0
        %1208 = vmatpush1.bf16.xpose.msra.mxu0 0
        %1209 = vmatprep.subr.bf16.mxu0 0
        %1210 = vmatpush1.bf16.xpose.msra.mxu0 0
        %1211 = vmatprep.subr.bf16.mxu0 0
        %1212 = vmatpush1.bf16.xpose.msra.mxu0 0
        %1213 = vmatprep.subr.bf16.mxu0 0
        %1214 = vmatpush1.bf16.xpose.msra.mxu0 0
        %1215 = vmatprep.subr.bf16.mxu0 0
        %1216 = vmatpush1.bf16.xpose.msra.mxu0 0
        %1217 = vmatprep.mubr.bf16.mxu0 0
        %1218 = vmatmul.mubr.bf16.gmra.mrb[0].mxu0 %v1180
        %v1219 = vpop.f32.mrb[0].mxu0
        %v1220 = vadd.f32 0.0, %v1219
        %v1221 = vpop.f32.mrb[0].mxu0
        %v1222 = vpop.f32.mrb[0].mxu0
        %v1223 = vpop.f32.mrb[0].mxu0
        %1224 = vdwg.mxu0
        %v1225 = vsel %vm955, %v1220, -inf
        %1226 = vmax.xlane.f32.xlu0 %v1225
        %v1227 = vpop.xlane.xlu0 %1226
        %v1228 = vsub.f32 %v1220, %v1227
        %v1229 = vmul.f32 %v1228, 1.442695
        %v1230 = vpow.pop %v1229
        %v1231 = vsel %vm955, %v1230, 0.0
        %1232 = vadd.xlane.f32.xlu0 %v1231
        %v1233 = vpop.xlane.xlu0 %1232
        %v1234 = vrcp.pop %v1233
        %v1235 = vmul.f32 %v1230, %v1234
        %v1236 = vpack.c.bf16 %v1235, %v1235
        %1237 = vrot.lane.b32.xlu0 %v1014, 112
        %v1238 = vpop.permute.xlu0 %1237
        %v1240 = vsel %vm955, %v1236, 0
        %v1243 = vsel %vm1018, %v1238, 0
        %1245 = vmatprep.subr.bf16.mxu0 0
        %1246 = vmatpush1.bf16.msra.mxu0 %v1243
        %1247 = vmatprep.subr.bf16.mxu0 0
        %1248 = vmatpush1.bf16.msra.mxu0 0
        %1249 = vmatprep.subr.bf16.mxu0 0
        %1250 = vmatpush1.bf16.msra.mxu0 0
        %1251 = vmatprep.subr.bf16.mxu0 0
        %1252 = vmatpush1.bf16.msra.mxu0 0
        %1253 = vmatprep.subr.bf16.mxu0 0
        %1254 = vmatpush1.bf16.msra.mxu0 0
        %1255 = vmatprep.subr.bf16.mxu0 0
        %1256 = vmatpush1.bf16.msra.mxu0 0
        %1257 = vmatprep.subr.bf16.mxu0 0
        %1258 = vmatpush1.bf16.msra.mxu0 0
        %1259 = vmatprep.subr.bf16.mxu0 0
        %1260 = vmatpush1.bf16.msra.mxu0 0
        %1261 = vmatprep.subr.bf16.mxu0 0
        %1262 = vmatpush1.bf16.msra.mxu0 0
        %1263 = vmatprep.subr.bf16.mxu0 0
        %1264 = vmatpush1.bf16.msra.mxu0 0
        %1265 = vmatprep.subr.bf16.mxu0 0
        %1266 = vmatpush1.bf16.msra.mxu0 0
        %1267 = vmatprep.subr.bf16.mxu0 0
        %1268 = vmatpush1.bf16.msra.mxu0 0
        %1269 = vmatprep.subr.bf16.mxu0 0
        %1270 = vmatpush1.bf16.msra.mxu0 0
        %1271 = vmatprep.subr.bf16.mxu0 0
        %1272 = vmatpush1.bf16.msra.mxu0 0
        %1273 = vmatprep.subr.bf16.mxu0 0
        %1274 = vmatpush1.bf16.msra.mxu0 0
        %1275 = vmatprep.subr.bf16.mxu0 0
        %1276 = vmatpush1.bf16.msra.mxu0 0
        %1277 = vmatprep.mubr.bf16.mxu0 0
        %1278 = vmatmul.mubr.bf16.gmra.mrb[0].mxu0 %v1240
        %v1279 = vpop.f32.mrb[0].mxu0
        %v1280 = vadd.f32 0.0, %v1279
        %v1281 = vpop.f32.mrb[0].mxu0
        %v1282 = vpop.f32.mrb[0].mxu0
        %v1283 = vpop.f32.mrb[0].mxu0
        %1284 = vdwg.mxu0
        %1285 = vrot.lane.b32.xlu0 %v953, 104
        %v1286 = vpop.permute.xlu0 %1285
        %1287 = vrot.lane.b32.xlu0 %v954, 104
        %v1288 = vpop.permute.xlu0 %1287
        %v1290 = vsel %vm955, %v1286, 0
        %v1293 = vsel %vm955, %v1288, 0
        %1295 = vmatprep.subr.bf16.mxu0 0
        %1296 = vmatpush1.bf16.xpose.msra.mxu0 %v1293
        %1297 = vmatprep.subr.bf16.mxu0 0
        %1298 = vmatpush1.bf16.xpose.msra.mxu0 0
        %1299 = vmatprep.subr.bf16.mxu0 0
        %1300 = vmatpush1.bf16.xpose.msra.mxu0 0
        %1301 = vmatprep.subr.bf16.mxu0 0
        %1302 = vmatpush1.bf16.xpose.msra.mxu0 0
        %1303 = vmatprep.subr.bf16.mxu0 0
        %1304 = vmatpush1.bf16.xpose.msra.mxu0 0
        %1305 = vmatprep.subr.bf16.mxu0 0
        %1306 = vmatpush1.bf16.xpose.msra.mxu0 0
        %1307 = vmatprep.subr.bf16.mxu0 0
        %1308 = vmatpush1.bf16.xpose.msra.mxu0 0
        %1309 = vmatprep.subr.bf16.mxu0 0
        %1310 = vmatpush1.bf16.xpose.msra.mxu0 0
        %1311 = vmatprep.subr.bf16.mxu0 0
        %1312 = vmatpush1.bf16.xpose.msra.mxu0 0
        %1313 = vmatprep.subr.bf16.mxu0 0
        %1314 = vmatpush1.bf16.xpose.msra.mxu0 0
        %1315 = vmatprep.subr.bf16.mxu0 0
        %1316 = vmatpush1.bf16.xpose.msra.mxu0 0
        %1317 = vmatprep.subr.bf16.mxu0 0
        %1318 = vmatpush1.bf16.xpose.msra.mxu0 0
        %1319 = vmatprep.subr.bf16.mxu0 0
        %1320 = vmatpush1.bf16.xpose.msra.mxu0 0
        %1321 = vmatprep.subr.bf16.mxu0 0
        %1322 = vmatpush1.bf16.xpose.msra.mxu0 0
        %1323 = vmatprep.subr.bf16.mxu0 0
        %1324 = vmatpush1.bf16.xpose.msra.mxu0 0
        %1325 = vmatprep.subr.bf16.mxu0 0
        %1326 = vmatpush1.bf16.xpose.msra.mxu0 0
        %1327 = vmatprep.mubr.bf16.mxu0 0
        %1328 = vmatmul.mubr.bf16.gmra.mrb[0].mxu0 %v1290
        %v1329 = vpop.f32.mrb[0].mxu0
        %v1330 = vadd.f32 0.0, %v1329
        %v1331 = vpop.f32.mrb[0].mxu0
        %v1332 = vpop.f32.mrb[0].mxu0
        %v1333 = vpop.f32.mrb[0].mxu0
        %1334 = vdwg.mxu0
        %v1335 = vsel %vm955, %v1330, -inf
        %1336 = vmax.xlane.f32.xlu0 %v1335
        %v1337 = vpop.xlane.xlu0 %1336
        %v1338 = vsub.f32 %v1330, %v1337
        %v1339 = vmul.f32 %v1338, 1.442695
        %v1340 = vpow.pop %v1339
        %v1341 = vsel %vm955, %v1340, 0.0
        %1342 = vadd.xlane.f32.xlu0 %v1341
        %v1343 = vpop.xlane.xlu0 %1342
        %v1344 = vrcp.pop %v1343
        %v1345 = vmul.f32 %v1340, %v1344
        %v1346 = vpack.c.bf16 %v1345, %v1345
        %1347 = vrot.lane.b32.xlu0 %v1014, 104
        %v1348 = vpop.permute.xlu0 %1347
        %v1350 = vsel %vm955, %v1346, 0
        %v1353 = vsel %vm1018, %v1348, 0
        %1355 = vmatprep.subr.bf16.mxu0 0
        %1356 = vmatpush1.bf16.msra.mxu0 %v1353
        %1357 = vmatprep.subr.bf16.mxu0 0
        %1358 = vmatpush1.bf16.msra.mxu0 0
        %1359 = vmatprep.subr.bf16.mxu0 0
        %1360 = vmatpush1.bf16.msra.mxu0 0
        %1361 = vmatprep.subr.bf16.mxu0 0
        %1362 = vmatpush1.bf16.msra.mxu0 0
        %1363 = vmatprep.subr.bf16.mxu0 0
        %1364 = vmatpush1.bf16.msra.mxu0 0
        %1365 = vmatprep.subr.bf16.mxu0 0
        %1366 = vmatpush1.bf16.msra.mxu0 0
        %1367 = vmatprep.subr.bf16.mxu0 0
        %1368 = vmatpush1.bf16.msra.mxu0 0
        %1369 = vmatprep.subr.bf16.mxu0 0
        %1370 = vmatpush1.bf16.msra.mxu0 0
        %1371 = vmatprep.subr.bf16.mxu0 0
        %1372 = vmatpush1.bf16.msra.mxu0 0
        %1373 = vmatprep.subr.bf16.mxu0 0
        %1374 = vmatpush1.bf16.msra.mxu0 0
        %1375 = vmatprep.subr.bf16.mxu0 0
        %1376 = vmatpush1.bf16.msra.mxu0 0
        %1377 = vmatprep.subr.bf16.mxu0 0
        %1378 = vmatpush1.bf16.msra.mxu0 0
        %1379 = vmatprep.subr.bf16.mxu0 0
        %1380 = vmatpush1.bf16.msra.mxu0 0
        %1381 = vmatprep.subr.bf16.mxu0 0
        %1382 = vmatpush1.bf16.msra.mxu0 0
        %1383 = vmatprep.subr.bf16.mxu0 0
        %1384 = vmatpush1.bf16.msra.mxu0 0
        %1385 = vmatprep.subr.bf16.mxu0 0
        %1386 = vmatpush1.bf16.msra.mxu0 0
        %1387 = vmatprep.mubr.bf16.mxu0 0
        %1388 = vmatmul.mubr.bf16.gmra.mrb[0].mxu0 %v1350
        %v1389 = vpop.f32.mrb[0].mxu0
        %v1390 = vadd.f32 0.0, %v1389
        %v1391 = vpop.f32.mrb[0].mxu0
        %v1392 = vpop.f32.mrb[0].mxu0
        %v1393 = vpop.f32.mrb[0].mxu0
        %1394 = vdwg.mxu0
        %1396 = vrot.lane.b32.xlu0 %v1170, 8
        %v1397 = vpop.permute.xlu0 %1396
        %1400 = vrot.lane.b32.xlu0 %v1280, 16
        %v1401 = vpop.permute.xlu0 %1400
        %1404 = vrot.lane.b32.xlu0 %v1390, 24
        %v1405 = vpop.permute.xlu0 %1404
        %v1407 = vsel %vm955, %v1057, %v1397
        %vm1408 = vcmask 130048
        %v1409 = vsel %vm1408, %v1407, %v1401
        %vm1410 = vcmask 195584
        %v1411 = vsel %vm1410, %v1409, %v1405
        %v1412 = vpack.c.bf16 %v1411, %v1411
        %v1413 = vld [vmem:[#allocation19] sm:$0xf]
        %v1414 = vld [vmem:[#allocation19 + $0x4] sm:$0xf]
        %v1415 = vld [vmem:[#allocation19 + $0x8] sm:$0xf]
        %v1416 = vld [vmem:[#allocation19 + $0xc] sm:$0xf]
        %v1417 = vld [vmem:[#allocation20] sm:$0x1]
        %v1419 = vlaneseq
        %v1420 = vshrl.u32 %v1419, 7
        %v1421 = vsub.s32 0, %v1420
        %v1422 = vrot.slane %v1417, %v1421
        %v1428 = vunpack.c.l.b16 %v1413
        %v1429 = vunpack.c.l.b16 %v1414
        %v1430 = vunpack.c.l.b16 %v1415
        %v1431 = vunpack.c.l.b16 %v1416
        %v1432 = vpack.c.b16 %v1429, %v1428
        %v1433 = vpack.c.b16 %v1431, %v1430
        %v1437 = vsel %vm777, %v1412, 0
        %1439 = vmatprep.subr.bf16.mxu0 0
        %1440 = vmatpush1.bf16.msra.mxu0 %v1432
        %1441 = vmatprep.subr.bf16.mxu0 0
        %1442 = vmatpush1.bf16.msra.mxu0 %v1433
        %1443 = vmatprep.subr.bf16.mxu0 0
        %1444 = vmatpush1.bf16.msra.mxu0 0
        %1445 = vmatprep.subr.bf16.mxu0 0
        %1446 = vmatpush1.bf16.msra.mxu0 0
        %1447 = vmatprep.subr.bf16.mxu0 0
        %1448 = vmatpush1.bf16.msra.mxu0 0
        %1449 = vmatprep.subr.bf16.mxu0 0
        %1450 = vmatpush1.bf16.msra.mxu0 0
        %1451 = vmatprep.subr.bf16.mxu0 0
        %1452 = vmatpush1.bf16.msra.mxu0 0
        %1453 = vmatprep.subr.bf16.mxu0 0
        %1454 = vmatpush1.bf16.msra.mxu0 0
        %1455 = vmatprep.subr.bf16.mxu0 0
        %1456 = vmatpush1.bf16.msra.mxu0 0
        %1457 = vmatprep.subr.bf16.mxu0 0
        %1458 = vmatpush1.bf16.msra.mxu0 0
        %1459 = vmatprep.subr.bf16.mxu0 0
        %1460 = vmatpush1.bf16.msra.mxu0 0
        %1461 = vmatprep.subr.bf16.mxu0 0
        %1462 = vmatpush1.bf16.msra.mxu0 0
        %1463 = vmatprep.subr.bf16.mxu0 0
        %1464 = vmatpush1.bf16.msra.mxu0 0
        %1465 = vmatprep.subr.bf16.mxu0 0
        %1466 = vmatpush1.bf16.msra.mxu0 0
        %1467 = vmatprep.subr.bf16.mxu0 0
        %1468 = vmatpush1.bf16.msra.mxu0 0
        %1469 = vmatprep.subr.bf16.mxu0 0
        %1470 = vmatpush1.bf16.msra.mxu0 0
        %1471 = vmatprep.mubr.bf16.mxu0 0
        %1472 = vmatmul.mubr.bf16.gmra.mrb[0].mxu0 %v1437
        %v1473 = vpop.f32.mrb[0].mxu0
        %v1474 = vadd.f32 %v1422, %v1473
        %v1475 = vpop.f32.mrb[0].mxu0
        %v1476 = vpop.f32.mrb[0].mxu0
        %v1477 = vpop.f32.mrb[0].mxu0
        %1478 = vdwg.mxu0
        %v1479 = vadd.f32 %v745, %v1474
        %v1480 = vsel %vm777, %v1479, 0.0
        %1481 = vadd.xlane.f32.xlu0 %v1480
        %v1482 = vpop.xlane.xlu0 %1481
        %v1483 = vrcp.pop 32.0
        %v1484 = vmul.f32 %v1482, %v1483
        %v1485 = vsub.f32 %v1479, %v1484
        %v1486 = vmul.f32 %v1485, %v1485
        %v1487 = vsel %vm777, %v1486, 0.0
        %1488 = vadd.xlane.f32.xlu0 %v1487
        %v1489 = vpop.xlane.xlu0 %1488
        %v1490 = vmul.f32 %v1489, %v1483
        %v1491 = vadd.f32 %v1490, 1e-05
        %v1492 = vrsqrt.pop %v1491
        %v1493 = vmul.f32 %v1485, %v1492
        %v1494 = vld [vmem:[#allocation22] sm:$0x1]
        %v1496 = vlaneseq
        %v1497 = vshrl.u32 %v1496, 7
        %v1498 = vsub.s32 0, %v1497
        %v1499 = vrot.slane %v1494, %v1498
        %v1501 = vmul.f32 %v1493, %v1499
        %v1502 = vld [vmem:[#allocation23] sm:$0x1]
        %v1504 = vlaneseq
        %v1505 = vshrl.u32 %v1504, 7
        %v1506 = vsub.s32 0, %v1505
        %v1507 = vrot.slane %v1502, %v1506
        %v1509 = vadd.f32 %v1501, %v1507
        %1510 = vst.msk [vmem:[%s743] sm:$0xff] %vm777, %v1509
        %s1511 = sand.u32 %s382, 1
        %s1512 = scalar_lea.sflag [#allocation4], %s1511
        %s1513 = sand.u32 %s382, 1
        %s1514 = smul.addr %s1513, 8
        %s1515 = scalar_lea.vmem [#allocation25], %s1514
        // Predicated region
        $region133: #{tpu_custom_call.1} parent=75 // pred_check
          %p1516 = pneg %p392
        $region134: #{tpu_custom_call.1} parent=75 // pred_check_branch
          %1518 = sbr.rel (%p1516) target = $region136
        $region135: #{tpu_custom_call.1} parent=75 // pred_region
          %s1520 = ssub.s32 128, 128
          %1521 = vsyncadd %s1512, %s1520
          %s1522 = sadd.s32 %s47, %s46
          %s1523 = smul.addr %s1522, 128
          %s1524 = scalar_lea.hbm %s14, %s1523
          %s1526 = sshll.u32 %s1515, 4
          %s1527 = int_to_ptr.vmem [resolvable:$true] %s1526
          %1529 = dma.vmem_to_hbm [thread:$0]  %s1527, 128, %s1524, %s1512
        $region136: #{tpu_custom_call.1} parent=75 // pred_fallthru
          _
      $region76: #{tpu_custom_call.1} parent=5 // pred_fallthru
        _
      %p1530 = scmp.le.s32.totalorder 2, %s37
      // Predicated region
      $region137: #{tpu_custom_call.1} parent=5 // pred_check
        %p1531 = pneg %p1530
      $region138: #{tpu_custom_call.1} parent=5 // pred_check_branch
        %1533 = sbr.rel (%p1531) target = $region140
      $region139: #{tpu_custom_call.1} parent=5 // pred_region
        %s1534 = ssub.s32 %s37, 2
        // Predicated region
        $region141: #{tpu_custom_call.1} parent=139 // pred_check
          %p1535 = pneg %p398
        $region142: #{tpu_custom_call.1} parent=139 // pred_check_branch
          %1537 = sbr.rel (%p1535) target = $region144
        $region143: #{tpu_custom_call.1} parent=139 // pred_region
          %s1538 = sand.u32 %s383, 1
          %s1539 = scalar_lea.sflag [#allocation4], %s1538
          %s1540 = sand.u32 %s383, 1
          %s1541 = smul.addr %s1540, 8
          %s1542 = scalar_lea.vmem [#allocation25], %s1541
          %1543 = dma.done %s1539, 128
        $region144: #{tpu_custom_call.1} parent=139 // pred_fallthru
          _
      $region140: #{tpu_custom_call.1} parent=5 // pred_fallthru
        _
    $region6: #{tpu_custom_call.1} parent=1 // loop_footer
      %s41 = sadd.s32 1, %s37
    $region7: #{tpu_custom_call.1} parent=1 // loop_footer_branch
      %36 = sbr.rel target = $region3
    $region8: #{tpu_custom_call.1} parent=1 // loop_exit
      _
    %1544 = vsyncpa [#allocation3], 1
    %s1545 = scalar_lea.sflag [#allocation3], 1
    %1546 = vsyncpa %s1545, 1
    %1547 = vsyncpa [#allocation6], 1
    %s1548 = scalar_lea.sflag [#allocation6], 1
    %1549 = vsyncpa %s1548, 1
    %1550 = vsyncpa [#allocation9], 1
    %s1551 = scalar_lea.sflag [#allocation9], 1
    %1552 = vsyncpa %s1551, 1
    %1553 = vsyncpa [#allocation12], 1
    %1554 = vsyncpa [#allocation15], 1
    %1555 = vsyncpa [#allocation18], 1
    %1556 = vsyncpa [#allocation21], 1
    %1557 = vsyncpa [#allocation24], 1
    %1558 = vsyncpa [#allocation4], 1
    %s1559 = scalar_lea.sflag [#allocation4], 1
    %1560 = vsyncpa %s1559, 1

</llo_original>
